<compile_context>
chip_gen: v5e
topology: v5e:2x2
jax: 0.10.0
libtpu: 0.0.40
codegen_flags: <defaults>
</compile_context>

<pallas_src>
import functools

import jax
import jax.numpy as jnp
from jax.experimental import pallas as pl
from jax.experimental.pallas import tpu as pltpu


def _round_up(x, m):
    return ((x + m - 1) // m) * m


# ----------------------------- Pallas kernel --------------------------------


def _code_modulation_kernel(
    coords_ref,   # (TM, num_in)
    we1_ref,      # (num_in, Hp)     embedding layer-1 weight (30x folded in)
    be1_ref,      # (1, Hp)          embedding layer-1 bias   (30x folded in)
    bfuse_ref,    # (1, Hp)          fused bias: be2@wm1e + code@wm1c + bm1
    wfuse_ref,    # (Hp, Hp)         fused weight: we2 @ wm1e     (mxu dtype)
    wf_ref,       # (Hp, num_out_pad) final_linear weight         (mxu dtype)
    bf_ref,       # (1, num_out_pad)  final_linear bias
    out_ref,      # (TM, num_out_pad)
    *,
    num_in,
    mxu_dtype,
):
    coords = coords_ref[...]

    # --- coord embedding layer 1 -------------------------------------------
    if num_in <= 4:
        # K = num_in is tiny: VPU broadcast-FMAs, bias seeds the accumulator.
        h1 = coords[:, 0:1] * we1_ref[0:1, :] + be1_ref[...]
        for d in range(1, num_in):
            h1 = h1 + coords[:, d:d + 1] * we1_ref[d:d + 1, :]
    else:
        h1 = jnp.dot(coords.astype(mxu_dtype), we1_ref[...].astype(mxu_dtype),
                     preferred_element_type=jnp.float32) + be1_ref[...]
    h1 = jnp.sin(h1)                                             # f32 (EUP)

    # --- fused: (h1@we2 + be2)@wm1e + code@wm1c + bm1 == h1@Wf + bfuse -------
    pre = jnp.dot(h1.astype(mxu_dtype), wfuse_ref[...],
                  preferred_element_type=jnp.float32) + bfuse_ref[...]
    h2 = jnp.maximum(pre, 0.0)                                   # f32 (VPU)

    # --- final_linear (lane-dense, zero-padded output columns) --------------
    out = jnp.dot(h2.astype(mxu_dtype), wf_ref[...],
                  preferred_element_type=jnp.float32) + bf_ref[...]
    out_ref[...] = out.astype(out_ref.dtype)


# ------------------------------- wrapper -------------------------------------


def code_modulation_forward(params, coords, patient_idx, *, tile_m=1024,
                            use_bf16=False):
    """coords: (..., num_in) float32; patient_idx: python int / scalar int."""
    num_in = coords.shape[-1]
    hidden = params["we1"].shape[-1]
    num_out = params["wf"].shape[-1]
    lead_shape = coords.shape[:-1]

    x = coords.reshape(-1, num_in).astype(jnp.float32)
    m = x.shape[0]

    # Row tile: as large as requested, but keep >= ~8 grid steps when M allows
    # (megacore sharding on v7x + enough steps for double-buffering).
    tile = min(tile_m, max(64, _round_up(pl.cdiv(m, 8), 8)))
    tile = max(8, _round_up(tile, 8))

    m_pad = _round_up(m, tile)
    if m_pad != m:
        x = jnp.pad(x, ((0, m_pad - m), (0, 0)))

    # Embedding-table lookup (the nn.Embedding) — plain JAX glue.
    code = jnp.take(params["code_table"], jnp.asarray(patient_idx, jnp.int32),
                    axis=0).reshape(1, -1)

    # --- algebraic fusion (one-time tiny matmuls in the wrapper) -------------
    # concat([emb, code]) @ wm1 + bm1
    #   == (h1@we2 + be2) @ wm1e + code @ wm1c + bm1
    #   ==  h1 @ (we2@wm1e) + (be2@wm1e + code@wm1c + bm1)
    w_fuse = params["we2"] @ params["wm1e"]                        # (H, H)
    b_fuse = (params["be2"] @ params["wm1e"]
              + code @ params["wm1c"] + params["bm1"])             # (1, H)

    # --- fold the SIREN 30x scale into layer-1 params (hoisted mul) ----------
    we1 = 30.0 * params["we1"]
    be1 = 30.0 * params["be1"]

    # --- lane-dense hidden & output: zero-pad to multiples of 128 ------------
    h_pad = _round_up(hidden, 128)
    n_pad = _round_up(num_out, 128)
    wf, bf = params["wf"], params["bf"]
    if h_pad != hidden:
        we1 = jnp.pad(we1, ((0, 0), (0, h_pad - hidden)))
        be1 = jnp.pad(be1, ((0, 0), (0, h_pad - hidden)))
        b_fuse = jnp.pad(b_fuse, ((0, 0), (0, h_pad - hidden)))
        w_fuse = jnp.pad(w_fuse, ((0, h_pad - hidden), (0, h_pad - hidden)))
        wf = jnp.pad(wf, ((0, h_pad - hidden), (0, 0)))
    if n_pad != num_out:
        wf = jnp.pad(wf, ((0, 0), (0, n_pad - num_out)))
        bf = jnp.pad(bf, ((0, 0), (0, n_pad - num_out)))

    # Optional bf16 MXU operands (f32 accumulation; elementwise stays f32).
    mxu_dtype = jnp.bfloat16 if use_bf16 else jnp.float32
    w_fuse = w_fuse.astype(mxu_dtype)
    wf = wf.astype(mxu_dtype)

    grid = (m_pad // tile,)
    full = lambda i: (0, 0)

    kernel = functools.partial(_code_modulation_kernel,
                               num_in=num_in, mxu_dtype=mxu_dtype)

    out = pl.pallas_call(
        kernel,
        out_shape=jax.ShapeDtypeStruct((m_pad, n_pad), jnp.float32),
        grid_spec=pltpu.PrefetchScalarGridSpec(
            num_scalar_prefetch=0,
            grid=grid,
            in_specs=[
                pl.BlockSpec((tile, num_in), lambda i: (i, 0)),  # coords tile
                pl.BlockSpec(we1.shape, full),
                pl.BlockSpec(be1.shape, full),
                pl.BlockSpec(b_fuse.shape, full),
                pl.BlockSpec(w_fuse.shape, full),
                pl.BlockSpec(wf.shape, full),
                pl.BlockSpec(bf.shape, full),
            ],
            out_specs=pl.BlockSpec((tile, n_pad), lambda i: (i, 0)),
        ),
        compiler_params=pltpu.CompilerParams(
            dimension_semantics=("parallel",),
            vmem_limit_bytes=32 * 1024 * 1024),
    )(x, we1, be1, b_fuse, w_fuse, wf, bf)

    out = out[:m, :num_out]
    return out.reshape(*lead_shape, num_out)


# ------------------------- deterministic init --------------------------------


def init_params(key, *, num_in, num_out, num_signals, code_dim, hidden,
                zero_init=True):
    ks = jax.random.split(key, 8)

    def uniform(k, shape, scale):
        return jax.random.uniform(k, shape, jnp.float32, -scale, scale)

    # code embedding table: uniform(-1, 1)  (matches module __init__)
    code_table = jax.random.uniform(ks[0], (num_signals, code_dim),
                                    jnp.float32, -1.0, 1.0)

    # coord embedding neural field (SIREN-style 2-layer MLP)
    we1 = uniform(ks[1], (num_in, hidden), 1.0 / num_in)
    be1 = jnp.zeros((1, hidden), jnp.float32)
    we2 = uniform(ks[2], (hidden, code_dim), jnp.sqrt(6.0 / hidden) / 30.0)
    be2 = jnp.zeros((1, code_dim), jnp.float32)

    # neural modulation field: first layer takes concat([emb, code]) (2*code_dim)
    wm1_full = uniform(ks[3], (2 * code_dim, hidden),
                       1.0 / jnp.sqrt(2.0 * code_dim))
    wm1e, wm1c = wm1_full[:code_dim], wm1_full[code_dim:]
    bm1 = jnp.zeros((1, hidden), jnp.float32)

    # final_linear (zero_init: weight ~ N(0, 1e-5), bias first half = 1)
    if zero_init:
        wf = 1e-5 * jax.random.normal(ks[4], (hidden, num_out), jnp.float32)
        bf = jnp.zeros((num_out,), jnp.float32).at[: num_out // 2].set(1.0)
    else:
        wf = uniform(ks[4], (hidden, num_out), 1.0 / jnp.sqrt(hidden))
        bf = jnp.zeros((num_out,), jnp.float32)
    bf = bf.reshape(1, num_out)

    return dict(code_table=code_table, we1=we1, be1=be1, we2=we2, be2=be2,
                wm1e=wm1e, wm1c=wm1c, bm1=bm1, wf=wf, bf=bf)


# ------------------------------ reference ------------------------------------


def reference_forward(params, coords, patient_idx):
    num_in = coords.shape[-1]
    x = coords.reshape(-1, num_in)
    code = params["code_table"][patient_idx][None, :]
    h1 = jnp.sin(30.0 * (x @ params["we1"] + params["be1"]))
    emb = h1 @ params["we2"] + params["be2"]
    code_b = jnp.broadcast_to(code, (x.shape[0], code.shape[-1]))
    mod_inp = jnp.concatenate([emb, code_b], axis=-1)
    w1 = jnp.concatenate([params["wm1e"], params["wm1c"]], axis=0)
    h2 = jnp.maximum(mod_inp @ w1 + params["bm1"], 0.0)
    out = h2 @ params["wf"] + params["bf"]
    return out.reshape(*coords.shape[:-1], -1)


# -------------------------------- main ----------------------------------------


if __name__ == "__main__":
    key = jax.random.PRNGKey(0)
    k_param, k_coords = jax.random.split(key)

    # small, module-consistent shapes
    num_in, num_out = 3, 32      # 3-D coordinates -> 32 modulations
    num_signals = 8              # number of patients / signals
    code_dim, hidden = 32, 64
    batch, spatial = 2, 16       # coords: (2, 16, 16, 3)

    params = init_params(k_param, num_in=num_in, num_out=num_out,
                         num_signals=num_signals, code_dim=code_dim,
                         hidden=hidden, zero_init=True)

    coords = jax.random.uniform(k_coords, (batch, spatial, spatial, num_in),
                                jnp.float32, -1.0, 1.0)
    patient_idx = 3

    ref = reference_forward(params, coords, patient_idx)

    # f32 MXU path (default; v5e-safe)
    fwd = jax.jit(functools.partial(code_modulation_forward, params))
    out = jax.block_until_ready(fwd(coords, patient_idx))
    assert out.shape == (batch, spatial, spatial, num_out)
    assert jnp.allclose(out, ref, atol=1e-4, rtol=1e-4)

    # bf16 MXU-operand path (main lever on v6e/v7x); accumulation stays f32.
    fwd_bf16 = jax.jit(functools.partial(code_modulation_forward, params,
                                         use_bf16=True))
    out_bf16 = jax.block_until_ready(fwd_bf16(coords, patient_idx))
    assert out_bf16.shape == (batch, spatial, spatial, num_out)
    assert jnp.allclose(out_bf16, ref, atol=1e-3, rtol=1e-3)

    print("KERNEL_OK")
</pallas_src>

<mosaic_0001>
module attributes {stable_mosaic.version = 11 : i64} {
  func.func @_code_modulation_kernel(%arg0: i32, %arg1: memref<64x3xf32, #tpu.memory_space<vmem>>, %arg2: memref<3x128xf32, #tpu.memory_space<vmem>>, %arg3: memref<1x128xf32, #tpu.memory_space<vmem>>, %arg4: memref<1x128xf32, #tpu.memory_space<vmem>>, %arg5: memref<128x128xf32, #tpu.memory_space<vmem>>, %arg6: memref<128x128xf32, #tpu.memory_space<vmem>>, %arg7: memref<1x128xf32, #tpu.memory_space<vmem>>, %arg8: memref<64x128xf32, #tpu.memory_space<vmem>>) attributes {dimension_semantics = [#tpu.dimension_semantics<parallel>], iteration_bounds = array<i64: 8>, scalar_prefetch = 0 : i64, scratch_operands = 0 : i64, tpu.core_type = #tpu.core_type<tc>, window_params = [{transform_indices = @transform_0, window_bounds = array<i64: 64, 3>}, {pipeline_mode = #tpu.pipeline_mode<synchronous>, transform_indices = @transform_1, window_bounds = array<i64: 3, 128>}, {pipeline_mode = #tpu.pipeline_mode<synchronous>, transform_indices = @transform_2, window_bounds = array<i64: 1, 128>}, {pipeline_mode = #tpu.pipeline_mode<synchronous>, transform_indices = @transform_3, window_bounds = array<i64: 1, 128>}, {pipeline_mode = #tpu.pipeline_mode<synchronous>, transform_indices = @transform_4, window_bounds = array<i64: 128, 128>}, {pipeline_mode = #tpu.pipeline_mode<synchronous>, transform_indices = @transform_5, window_bounds = array<i64: 128, 128>}, {pipeline_mode = #tpu.pipeline_mode<synchronous>, transform_indices = @transform_6, window_bounds = array<i64: 1, 128>}, {transform_indices = @transform_7, window_bounds = array<i64: 64, 128>}]} {
    %c0 = arith.constant 0 : index
    %c0_0 = arith.constant 0 : index
    %0 = vector.load %arg1[%c0, %c0_0] : memref<64x3xf32, #tpu.memory_space<vmem>>, vector<64x3xf32>
    %1 = vector.extract_strided_slice %0 {offsets = [0, 0], sizes = [64, 1], strides = [1, 1]} : vector<64x3xf32> to vector<64x1xf32>
    %c0_1 = arith.constant 0 : index
    %c0_2 = arith.constant 0 : index
    %2 = vector.load %arg2[%c0_1, %c0_2] : memref<3x128xf32, #tpu.memory_space<vmem>>, vector<1x128xf32>
    %3 = vector.broadcast %1 : vector<64x1xf32> to vector<64x128xf32>
    %4 = vector.broadcast %2 : vector<1x128xf32> to vector<64x128xf32>
    %5 = arith.mulf %3, %4 : vector<64x128xf32>
    %c0_3 = arith.constant 0 : index
    %c0_4 = arith.constant 0 : index
    %6 = vector.load %arg3[%c0_3, %c0_4] : memref<1x128xf32, #tpu.memory_space<vmem>>, vector<1x128xf32>
    %7 = vector.broadcast %6 : vector<1x128xf32> to vector<64x128xf32>
    %8 = arith.addf %5, %7 : vector<64x128xf32>
    %9 = vector.extract_strided_slice %0 {offsets = [0, 1], sizes = [64, 1], strides = [1, 1]} : vector<64x3xf32> to vector<64x1xf32>
    %c1 = arith.constant 1 : index
    %c0_5 = arith.constant 0 : index
    %10 = vector.load %arg2[%c1, %c0_5] : memref<3x128xf32, #tpu.memory_space<vmem>>, vector<1x128xf32>
    %11 = vector.broadcast %9 : vector<64x1xf32> to vector<64x128xf32>
    %12 = vector.broadcast %10 : vector<1x128xf32> to vector<64x128xf32>
    %13 = arith.mulf %11, %12 : vector<64x128xf32>
    %14 = arith.addf %8, %13 : vector<64x128xf32>
    %15 = vector.extract_strided_slice %0 {offsets = [0, 2], sizes = [64, 1], strides = [1, 1]} : vector<64x3xf32> to vector<64x1xf32>
    %c2 = arith.constant 2 : index
    %c0_6 = arith.constant 0 : index
    %16 = vector.load %arg2[%c2, %c0_6] : memref<3x128xf32, #tpu.memory_space<vmem>>, vector<1x128xf32>
    %17 = vector.broadcast %15 : vector<64x1xf32> to vector<64x128xf32>
    %18 = vector.broadcast %16 : vector<1x128xf32> to vector<64x128xf32>
    %19 = arith.mulf %17, %18 : vector<64x128xf32>
    %20 = arith.addf %14, %19 : vector<64x128xf32>
    %21 = math.sin %20 : vector<64x128xf32>
    %c0_7 = arith.constant 0 : index
    %c0_8 = arith.constant 0 : index
    %22 = vector.load %arg5[%c0_7, %c0_8] : memref<128x128xf32, #tpu.memory_space<vmem>>, vector<128x128xf32>
    %cst = arith.constant dense<0.000000e+00> : vector<64x128xf32>
    %23 = tpu.matmul %21, %22, %cst {dimension_numbers = #tpu.dot_dimension_numbers<[1], [0], [0], [1], [0, 0, 1, 1], [], []>} : vector<64x128xf32>, vector<128x128xf32>, vector<64x128xf32> -> vector<64x128xf32>
    %c0_9 = arith.constant 0 : index
    %c0_10 = arith.constant 0 : index
    %24 = vector.load %arg4[%c0_9, %c0_10] : memref<1x128xf32, #tpu.memory_space<vmem>>, vector<1x128xf32>
    %25 = vector.broadcast %24 : vector<1x128xf32> to vector<64x128xf32>
    %26 = arith.addf %23, %25 : vector<64x128xf32>
    %cst_11 = arith.constant 0.000000e+00 : f32
    %27 = vector.broadcast %cst_11 : f32 to vector<64x128xf32>
    %28 = arith.maximumf %26, %27 : vector<64x128xf32>
    %c0_12 = arith.constant 0 : index
    %c0_13 = arith.constant 0 : index
    %29 = vector.load %arg6[%c0_12, %c0_13] : memref<128x128xf32, #tpu.memory_space<vmem>>, vector<128x128xf32>
    %cst_14 = arith.constant dense<0.000000e+00> : vector<64x128xf32>
    %30 = tpu.matmul %28, %29, %cst_14 {dimension_numbers = #tpu.dot_dimension_numbers<[1], [0], [0], [1], [0, 0, 1, 1], [], []>} : vector<64x128xf32>, vector<128x128xf32>, vector<64x128xf32> -> vector<64x128xf32>
    %c0_15 = arith.constant 0 : index
    %c0_16 = arith.constant 0 : index
    %31 = vector.load %arg7[%c0_15, %c0_16] : memref<1x128xf32, #tpu.memory_space<vmem>>, vector<1x128xf32>
    %32 = vector.broadcast %31 : vector<1x128xf32> to vector<64x128xf32>
    %33 = arith.addf %30, %32 : vector<64x128xf32>
    %c0_17 = arith.constant 0 : index
    %c0_18 = arith.constant 0 : index
    %34 = vector.load %arg8[%c0_17, %c0_18] : memref<64x128xf32, #tpu.memory_space<vmem>>, vector<64x128xf32>
    tpu.vector_store %arg8[%c0_17, %c0_18], %33 {strides = array<i32>} : memref<64x128xf32, #tpu.memory_space<vmem>>, vector<64x128xf32>,
    return
  }
  func.func @transform_0(%arg0: i32) -> (i32, i32) {
    %c0_i32 = arith.constant 0 : i32
    %c0_i32_0 = arith.constant 0 : i32
    return %arg0, %c0_i32 : i32, i32
  }
  func.func @transform_1(%arg0: i32) -> (i32, i32) {
    %c0_i32 = arith.constant 0 : i32
    %c0_i32_0 = arith.constant 0 : i32
    %c0_i32_1 = arith.constant 0 : i32
    return %c0_i32, %c0_i32_0 : i32, i32
  }
  func.func @transform_2(%arg0: i32) -> (i32, i32) {
    %c0_i32 = arith.constant 0 : i32
    %c0_i32_0 = arith.constant 0 : i32
    %c0_i32_1 = arith.constant 0 : i32
    return %c0_i32, %c0_i32_0 : i32, i32
  }
  func.func @transform_3(%arg0: i32) -> (i32, i32) {
    %c0_i32 = arith.constant 0 : i32
    %c0_i32_0 = arith.constant 0 : i32
    %c0_i32_1 = arith.constant 0 : i32
    return %c0_i32, %c0_i32_0 : i32, i32
  }
  func.func @transform_4(%arg0: i32) -> (i32, i32) {
    %c0_i32 = arith.constant 0 : i32
    %c0_i32_0 = arith.constant 0 : i32
    %c0_i32_1 = arith.constant 0 : i32
    return %c0_i32, %c0_i32_0 : i32, i32
  }
  func.func @transform_5(%arg0: i32) -> (i32, i32) {
    %c0_i32 = arith.constant 0 : i32
    %c0_i32_0 = arith.constant 0 : i32
    %c0_i32_1 = arith.constant 0 : i32
    return %c0_i32, %c0_i32_0 : i32, i32
  }
  func.func @transform_6(%arg0: i32) -> (i32, i32) {
    %c0_i32 = arith.constant 0 : i32
    %c0_i32_0 = arith.constant 0 : i32
    %c0_i32_1 = arith.constant 0 : i32
    return %c0_i32, %c0_i32_0 : i32, i32
  }
  func.func @transform_7(%arg0: i32) -> (i32, i32) {
    %c0_i32 = arith.constant 0 : i32
    %c0_i32_0 = arith.constant 0 : i32
    return %arg0, %c0_i32 : i32, i32
  }
}

</mosaic_0001>

<llo_original>
// kernel: mul.1
$region0: #{mul.1}
  #allocation0 [shape = 's32[1]{0}', space=sflag, size = 0x4, scoped, tag = 'scoped memory for mul.1']
  %s0 = inlined_call_operand.<no memory space> [shape: f32[], index: 0, kind: input, shape index: {}]
  %s1 = inlined_call_operand.vmem [shape: f32[64], index: 1, kind: output, shape index: {}]
  %v2 = vstv %s0
  %3 = vst [vmem:[%s1] sm:$0x1] %v2

// kernel: code_modulation_forward.1
$region0: #{code_modulation_forward.1}
  #allocation0 [shape = 'u32[]', space=smem, size = 0x4, offset = 0x4, fixed_abs, tag = 'smem constant byte address 0x4 - core index']
  #allocation1 [shape = 'u32[72,128]{1,0:T(1,128)}', space=vmem, size = 0x9000, scoped, tag = 'internal scratch']
  %s0 = inlined_call_operand.vmem [shape: f32[512,3], index: 0, kind: input, shape index: {}]
  %s1 = inlined_call_operand.vmem [shape: f32[3,128], index: 1, kind: input, shape index: {}]
  %s2 = inlined_call_operand.vmem [shape: f32[1,128], index: 2, kind: input, shape index: {}]
  %s3 = inlined_call_operand.vmem [shape: f32[1,128], index: 3, kind: input, shape index: {}]
  %s4 = inlined_call_operand.vmem [shape: f32[128,128], index: 4, kind: input, shape index: {}]
  %s5 = inlined_call_operand.vmem [shape: f32[128,128], index: 5, kind: input, shape index: {}]
  %s6 = inlined_call_operand.vmem [shape: f32[1,128], index: 6, kind: input, shape index: {}]
  %s7 = inlined_call_operand.hbm [shape: f32[512,128], index: 7, kind: output, shape index: {}]
  %s8 = sld [smem:[#allocation0]]
  $region61: #{code_modulation_forward.1} parent=0
    _
  %s10 = ssub.s32 1, %s8
  %s11 = scalar_select 0, %s10, %s8
  $region1: #{code_modulation_forward.1} parent=0
    #allocation2 [shape = 'u8[65536]{0}', space=vmem, size = 0x10000, scoped, tag = 'output window, operand 0']
    #allocation3 [shape = 's32[2]{0}', space=sflag, size = 0x8, scoped, tag = 'scoped memory for code_modulation_forward.1']
    %12 = vsyncpa [#allocation3], 0
    %s13 = scalar_lea.sflag [#allocation3], 1
    %14 = vsyncpa %s13, 0
    loop: start=0, step=1, limit=10
    $region2: #{code_modulation_forward.1} parent=1 // loop_pre_header
      _
    $region3: #{code_modulation_forward.1} parent=1 // loop_header
      %s16 = sphi 0, %s20
      %p17 = scmp.ge.s32.totalorder %s16, 10
      %s26 = sphi 0, %s28
      %s29 = sphi 0, %s26
      %s30 = sphi 0, %s29
      %s46 = sphi 0, %s30
      %s50 = sphi 0, %s50
      %s52 = sphi 0, %s50
      %s53 = sphi 0, %s52
      %s67 = sphi 0, %s53
      %s71 = sphi 0, %s71
      %s73 = sphi 0, %s71
      %s74 = sphi 0, %s73
      %s88 = sphi 0, %s74
      %s92 = sphi 0, %s92
      %s94 = sphi 0, %s92
      %s95 = sphi 0, %s94
      %s109 = sphi 0, %s95
      %s113 = sphi 0, %s113
      %s115 = sphi 0, %s113
      %s116 = sphi 0, %s115
      %s130 = sphi 0, %s116
      %s134 = sphi 0, %s134
      %s136 = sphi 0, %s134
      %s137 = sphi 0, %s136
      %s151 = sphi 0, %s137
      %s155 = sphi 0, %s155
      %s157 = sphi 0, %s155
      %s158 = sphi 0, %s157
      %s172 = sphi 0, %s158
      %s178 = sphi 0, %s180
      %s181 = sphi 0, %s178
      %s182 = sphi 0, %s181
      %s198 = sphi 0, %s182
    $region4: #{code_modulation_forward.1} parent=1 // loop_header_branch
      %19 = sbr.rel (%p17) target = $region8
    $region5: #{code_modulation_forward.1} parent=1 // loop_body
      %s21 = ssub.s32 %s16, 1
      %s22 = ssub.s32 %s16, 2
      %s23 = sadd.s32 %s16, 1
      %s24 = ssub.s32 %s16, %s23
      %p25 = scmp.eq.s32.totalorder %s24, 0
      %s27 = sadd.s32 %s26, 1
      %s28 = scalar_select %p25, %s26, %s27
      %p31 = pneg %p25
      %p32 = scmp.eq.s32.totalorder %s16, 7
      %p33 = por %p31, %p32
      %p34 = scmp.ne.s32.totalorder %s26, %s29
      %p35 = scmp.eq.s32.totalorder %s16, 0
      %p36 = por %p34, %p35
      %p37 = scmp.ne.s32.totalorder %s26, %s29
      %p38 = scmp.eq.s32.totalorder %s21, 7
      %p39 = por %p37, %p38
      %p40 = scmp.ne.s32.totalorder %s29, %s30
      %p41 = scmp.eq.s32.totalorder %s21, 0
      %p42 = por %p40, %p41
      %p43 = scmp.ne.s32.totalorder %s29, %s30
      %p44 = scmp.eq.s32.totalorder %s22, 7
      %p45 = por %p43, %p44
      %p47 = scmp.ne.s32.totalorder %s30, %s46
      %p48 = scmp.eq.s32.totalorder %s22, 0
      %p49 = por %p47, %p48
      %s51 = sadd.s32 %s50, 1
      %p54 = scmp.eq.s32.totalorder %s16, 7
      %p55 = scmp.ne.s32.totalorder %s50, %s52
      %p56 = scmp.eq.s32.totalorder %s16, 0
      %p57 = por %p55, %p56
      %p58 = scmp.ne.s32.totalorder %s50, %s52
      %p59 = scmp.eq.s32.totalorder %s21, 7
      %p60 = por %p58, %p59
      %p61 = scmp.ne.s32.totalorder %s52, %s53
      %p62 = scmp.eq.s32.totalorder %s21, 0
      %p63 = por %p61, %p62
      %p64 = scmp.ne.s32.totalorder %s52, %s53
      %p65 = scmp.eq.s32.totalorder %s22, 7
      %p66 = por %p64, %p65
      %p68 = scmp.ne.s32.totalorder %s53, %s67
      %p69 = scmp.eq.s32.totalorder %s22, 0
      %p70 = por %p68, %p69
      %s72 = sadd.s32 %s71, 1
      %p75 = scmp.eq.s32.totalorder %s16, 7
      %p76 = scmp.ne.s32.totalorder %s71, %s73
      %p77 = scmp.eq.s32.totalorder %s16, 0
      %p78 = por %p76, %p77
      %p79 = scmp.ne.s32.totalorder %s71, %s73
      %p80 = scmp.eq.s32.totalorder %s21, 7
      %p81 = por %p79, %p80
      %p82 = scmp.ne.s32.totalorder %s73, %s74
      %p83 = scmp.eq.s32.totalorder %s21, 0
      %p84 = por %p82, %p83
      %p85 = scmp.ne.s32.totalorder %s73, %s74
      %p86 = scmp.eq.s32.totalorder %s22, 7
      %p87 = por %p85, %p86
      %p89 = scmp.ne.s32.totalorder %s74, %s88
      %p90 = scmp.eq.s32.totalorder %s22, 0
      %p91 = por %p89, %p90
      %s93 = sadd.s32 %s92, 1
      %p96 = scmp.eq.s32.totalorder %s16, 7
      %p97 = scmp.ne.s32.totalorder %s92, %s94
      %p98 = scmp.eq.s32.totalorder %s16, 0
      %p99 = por %p97, %p98
      %p100 = scmp.ne.s32.totalorder %s92, %s94
      %p101 = scmp.eq.s32.totalorder %s21, 7
      %p102 = por %p100, %p101
      %p103 = scmp.ne.s32.totalorder %s94, %s95
      %p104 = scmp.eq.s32.totalorder %s21, 0
      %p105 = por %p103, %p104
      %p106 = scmp.ne.s32.totalorder %s94, %s95
      %p107 = scmp.eq.s32.totalorder %s22, 7
      %p108 = por %p106, %p107
      %p110 = scmp.ne.s32.totalorder %s95, %s109
      %p111 = scmp.eq.s32.totalorder %s22, 0
      %p112 = por %p110, %p111
      %s114 = sadd.s32 %s113, 1
      %p117 = scmp.eq.s32.totalorder %s16, 7
      %p118 = scmp.ne.s32.totalorder %s113, %s115
      %p119 = scmp.eq.s32.totalorder %s16, 0
      %p120 = por %p118, %p119
      %p121 = scmp.ne.s32.totalorder %s113, %s115
      %p122 = scmp.eq.s32.totalorder %s21, 7
      %p123 = por %p121, %p122
      %p124 = scmp.ne.s32.totalorder %s115, %s116
      %p125 = scmp.eq.s32.totalorder %s21, 0
      %p126 = por %p124, %p125
      %p127 = scmp.ne.s32.totalorder %s115, %s116
      %p128 = scmp.eq.s32.totalorder %s22, 7
      %p129 = por %p127, %p128
      %p131 = scmp.ne.s32.totalorder %s116, %s130
      %p132 = scmp.eq.s32.totalorder %s22, 0
      %p133 = por %p131, %p132
      %s135 = sadd.s32 %s134, 1
      %p138 = scmp.eq.s32.totalorder %s16, 7
      %p139 = scmp.ne.s32.totalorder %s134, %s136
      %p140 = scmp.eq.s32.totalorder %s16, 0
      %p141 = por %p139, %p140
      %p142 = scmp.ne.s32.totalorder %s134, %s136
      %p143 = scmp.eq.s32.totalorder %s21, 7
      %p144 = por %p142, %p143
      %p145 = scmp.ne.s32.totalorder %s136, %s137
      %p146 = scmp.eq.s32.totalorder %s21, 0
      %p147 = por %p145, %p146
      %p148 = scmp.ne.s32.totalorder %s136, %s137
      %p149 = scmp.eq.s32.totalorder %s22, 7
      %p150 = por %p148, %p149
      %p152 = scmp.ne.s32.totalorder %s137, %s151
      %p153 = scmp.eq.s32.totalorder %s22, 0
      %p154 = por %p152, %p153
      %s156 = sadd.s32 %s155, 1
      %p159 = scmp.eq.s32.totalorder %s16, 7
      %p160 = scmp.ne.s32.totalorder %s155, %s157
      %p161 = scmp.eq.s32.totalorder %s16, 0
      %p162 = por %p160, %p161
      %p163 = scmp.ne.s32.totalorder %s155, %s157
      %p164 = scmp.eq.s32.totalorder %s21, 7
      %p165 = por %p163, %p164
      %p166 = scmp.ne.s32.totalorder %s157, %s158
      %p167 = scmp.eq.s32.totalorder %s21, 0
      %p168 = por %p166, %p167
      %p169 = scmp.ne.s32.totalorder %s157, %s158
      %p170 = scmp.eq.s32.totalorder %s22, 7
      %p171 = por %p169, %p170
      %p173 = scmp.ne.s32.totalorder %s158, %s172
      %p174 = scmp.eq.s32.totalorder %s22, 0
      %p175 = por %p173, %p174
      %s176 = ssub.s32 %s16, %s23
      %p177 = scmp.eq.s32.totalorder %s176, 0
      %s179 = sadd.s32 %s178, 1
      %s180 = scalar_select %p177, %s178, %s179
      %p183 = pneg %p177
      %p184 = scmp.eq.s32.totalorder %s16, 7
      %p185 = por %p183, %p184
      %p186 = scmp.ne.s32.totalorder %s178, %s181
      %p187 = scmp.eq.s32.totalorder %s16, 0
      %p188 = por %p186, %p187
      %p189 = scmp.ne.s32.totalorder %s178, %s181
      %p190 = scmp.eq.s32.totalorder %s21, 7
      %p191 = por %p189, %p190
      %p192 = scmp.ne.s32.totalorder %s181, %s182
      %p193 = scmp.eq.s32.totalorder %s21, 0
      %p194 = por %p192, %p193
      %p195 = scmp.ne.s32.totalorder %s181, %s182
      %p196 = scmp.eq.s32.totalorder %s22, 7
      %p197 = por %p195, %p196
      %p199 = scmp.ne.s32.totalorder %s182, %s198
      %p200 = scmp.eq.s32.totalorder %s22, 0
      %p201 = por %p199, %p200
      %p202 = scmp.le.s32.totalorder 1, %s16
      %p203 = scmp.lt.s32.totalorder %s16, 9
      %p204 = pnand %p202, %p203
      %p205 = pneg %p204
      // Predicated region
      $region9: #{code_modulation_forward.1} parent=5 // pred_check
        _
      $region10: #{code_modulation_forward.1} parent=5 // pred_check_branch
        %207 = sbr.rel (%p204) target = $region12
      $region11: #{code_modulation_forward.1} parent=5 // pred_region
        %s208 = ssub.s32 %s16, 1
        // Predicated region
        $region13: #{code_modulation_forward.1} parent=11 // pred_check
          %p209 = pneg %p63
        $region14: #{code_modulation_forward.1} parent=11 // pred_check_branch
          %211 = sbr.rel (%p209) target = $region16
        $region15: #{code_modulation_forward.1} parent=11 // pred_region
          _
        $region16: #{code_modulation_forward.1} parent=11 // pred_fallthru
          _
        // Predicated region
        $region17: #{code_modulation_forward.1} parent=11 // pred_check
          %p212 = pneg %p84
        $region18: #{code_modulation_forward.1} parent=11 // pred_check_branch
          %214 = sbr.rel (%p212) target = $region20
        $region19: #{code_modulation_forward.1} parent=11 // pred_region
          _
        $region20: #{code_modulation_forward.1} parent=11 // pred_fallthru
          _
        // Predicated region
        $region21: #{code_modulation_forward.1} parent=11 // pred_check
          %p215 = pneg %p105
        $region22: #{code_modulation_forward.1} parent=11 // pred_check_branch
          %217 = sbr.rel (%p215) target = $region24
        $region23: #{code_modulation_forward.1} parent=11 // pred_region
          _
        $region24: #{code_modulation_forward.1} parent=11 // pred_fallthru
          _
        // Predicated region
        $region25: #{code_modulation_forward.1} parent=11 // pred_check
          %p218 = pneg %p126
        $region26: #{code_modulation_forward.1} parent=11 // pred_check_branch
          %220 = sbr.rel (%p218) target = $region28
        $region27: #{code_modulation_forward.1} parent=11 // pred_region
          _
        $region28: #{code_modulation_forward.1} parent=11 // pred_fallthru
          _
        // Predicated region
        $region29: #{code_modulation_forward.1} parent=11 // pred_check
          %p221 = pneg %p147
        $region30: #{code_modulation_forward.1} parent=11 // pred_check_branch
          %223 = sbr.rel (%p221) target = $region32
        $region31: #{code_modulation_forward.1} parent=11 // pred_region
          _
        $region32: #{code_modulation_forward.1} parent=11 // pred_fallthru
          _
        // Predicated region
        $region33: #{code_modulation_forward.1} parent=11 // pred_check
          %p224 = pneg %p168
        $region34: #{code_modulation_forward.1} parent=11 // pred_check_branch
          %226 = sbr.rel (%p224) target = $region36
        $region35: #{code_modulation_forward.1} parent=11 // pred_region
          _
        $region36: #{code_modulation_forward.1} parent=11 // pred_fallthru
          _
      $region12: #{code_modulation_forward.1} parent=5 // pred_fallthru
        _
      %p227 = scmp.lt.s32.totalorder %s16, 8
      // Predicated region
      $region37: #{code_modulation_forward.1} parent=5 // pred_check
        %p228 = pneg %p227
      $region38: #{code_modulation_forward.1} parent=5 // pred_check_branch
        %230 = sbr.rel (%p228) target = $region40
      $region39: #{code_modulation_forward.1} parent=5 // pred_region
        // Predicated region
        $region41: #{code_modulation_forward.1} parent=39 // pred_check
          %p231 = pneg %p36
        $region42: #{code_modulation_forward.1} parent=39 // pred_check_branch
          %233 = sbr.rel (%p231) target = $region44
        $region43: #{code_modulation_forward.1} parent=39 // pred_region
          %s234 = smul.u32 8, %s16
          %p235 = scmp.lt.s32.totalorder %s234, 63
          %s236 = scalar_select %p235, %s234, 63
          %s237 = smul.addr %s236, 8
          %s238 = scalar_lea.vmem %s0, %s237
          %s239 = smul.u32 8, %s16
        $region44: #{code_modulation_forward.1} parent=39 // pred_fallthru
          _
      $region40: #{code_modulation_forward.1} parent=5 // pred_fallthru
        _
      %p240 = scmp.le.s32.totalorder 1, %s16
      %p241 = scmp.lt.s32.totalorder %s16, 9
      %p242 = pnand %p240, %p241
      %p243 = pneg %p242
      // Predicated region
      $region45: #{code_modulation_forward.1} parent=5 // pred_check
        _
      $region46: #{code_modulation_forward.1} parent=5 // pred_check_branch
        %245 = sbr.rel (%p242) target = $region48
      $region47: #{code_modulation_forward.1} parent=5 // pred_region
        %s246 = ssub.s32 %s16, 1
        %s247 = smul.u32 8, %s21
        %p248 = scmp.lt.s32.totalorder %s247, 63
        %s249 = scalar_select %p248, %s247, 63
        %s250 = smul.addr %s249, 8
        %s251 = scalar_lea.vmem %s0, %s250
        %p252 = pneg %p42
        %p253 = pneg %p39
        %p254 = pneg %p63
        %p255 = pneg %p60
        %p256 = pneg %p84
        %p257 = pneg %p81
        %p258 = pneg %p105
        %p259 = pneg %p102
        %p260 = pneg %p126
        %p261 = pneg %p123
        %p262 = pneg %p147
        %p263 = pneg %p144
        %p264 = pneg %p168
        %p265 = pneg %p165
        %p266 = pneg %p194
        %p267 = pneg %p191
        %s268 = sand.u32 %s181, 1
        %s269 = scalar_lea.sflag [#allocation3], %s268
        %s270 = sand.u32 %s181, 1
        %s271 = smul.addr %s270, 64
        %s272 = scalar_lea.vmem [#allocation2], %s271
        %s273 = smul.u32 8, %s21
        %p274 = scmp.lt.s32.totalorder %s273, 63
        %s275 = scalar_select %p274, %s273, 63
        %s276 = smul.addr %s275, 8
        %s277 = scalar_lea.vmem %s0, %s276
        %s278 = smul.u32 8, %s21
        %s279 = smul.u32 8, %s21
        %v280 = vld [vmem:[%s277] sm:$0xff]
        %v281 = vld [vmem:[%s277 + $0x8] sm:$0xff]
        %v282 = vld [vmem:[%s277 + $0x10] sm:$0xff]
        %v283 = vld [vmem:[%s277 + $0x18] sm:$0xff]
        %v284 = vld [vmem:[%s277 + $0x20] sm:$0xff]
        %v285 = vld [vmem:[%s277 + $0x28] sm:$0xff]
        %v286 = vld [vmem:[%s277 + $0x30] sm:$0xff]
        %v287 = vld [vmem:[%s277 + $0x38] sm:$0xff]
        %v288 = vld [vmem:[%s1] sm:$0x1]
        %290 = vset.pattern.permute.xlu0 0
        %291 = vperm.xlu0 %290, %v280
        %v292 = vpop.permute.xlu0 %291
        %295 = vset.pattern.permute.xlu0 0
        %296 = vperm.xlu0 %295, %v281
        %v297 = vpop.permute.xlu0 %296
        %300 = vset.pattern.permute.xlu0 0
        %301 = vperm.xlu0 %300, %v282
        %v302 = vpop.permute.xlu0 %301
        %305 = vset.pattern.permute.xlu0 0
        %306 = vperm.xlu0 %305, %v283
        %v307 = vpop.permute.xlu0 %306
        %310 = vset.pattern.permute.xlu0 0
        %311 = vperm.xlu0 %310, %v284
        %v312 = vpop.permute.xlu0 %311
        %315 = vset.pattern.permute.xlu0 0
        %316 = vperm.xlu0 %315, %v285
        %v317 = vpop.permute.xlu0 %316
        %320 = vset.pattern.permute.xlu0 0
        %321 = vperm.xlu0 %320, %v286
        %v322 = vpop.permute.xlu0 %321
        %325 = vset.pattern.permute.xlu0 0
        %326 = vperm.xlu0 %325, %v287
        %v327 = vpop.permute.xlu0 %326
        %v329 = vperm.slane %v288, 0
        %v330 = vmul.f32 %v292, %v329
        %v331 = vmul.f32 %v297, %v329
        %v332 = vmul.f32 %v302, %v329
        %v333 = vmul.f32 %v307, %v329
        %v334 = vmul.f32 %v312, %v329
        %v335 = vmul.f32 %v317, %v329
        %v336 = vmul.f32 %v322, %v329
        %v337 = vmul.f32 %v327, %v329
        %v338 = vld [vmem:[%s2] sm:$0x1]
        %v340 = vperm.slane %v338, 0
        %v342 = vadd.f32 %v330, %v340
        %v343 = vadd.f32 %v331, %v340
        %v344 = vadd.f32 %v332, %v340
        %v345 = vadd.f32 %v333, %v340
        %v346 = vadd.f32 %v334, %v340
        %v347 = vadd.f32 %v335, %v340
        %v348 = vadd.f32 %v336, %v340
        %v349 = vadd.f32 %v337, %v340
        %v350 = vld [vmem:[%s1 + $0x1] sm:$0x1]
        %351 = vset.pattern.permute.xlu0 1
        %352 = vperm.xlu0 %351, %v280
        %v353 = vpop.permute.xlu0 %352
        %355 = vset.pattern.permute.xlu0 1
        %356 = vperm.xlu0 %355, %v281
        %v357 = vpop.permute.xlu0 %356
        %359 = vset.pattern.permute.xlu0 1
        %360 = vperm.xlu0 %359, %v282
        %v361 = vpop.permute.xlu0 %360
        %363 = vset.pattern.permute.xlu0 1
        %364 = vperm.xlu0 %363, %v283
        %v365 = vpop.permute.xlu0 %364
        %367 = vset.pattern.permute.xlu0 1
        %368 = vperm.xlu0 %367, %v284
        %v369 = vpop.permute.xlu0 %368
        %371 = vset.pattern.permute.xlu0 1
        %372 = vperm.xlu0 %371, %v285
        %v373 = vpop.permute.xlu0 %372
        %375 = vset.pattern.permute.xlu0 1
        %376 = vperm.xlu0 %375, %v286
        %v377 = vpop.permute.xlu0 %376
        %379 = vset.pattern.permute.xlu0 1
        %380 = vperm.xlu0 %379, %v287
        %v381 = vpop.permute.xlu0 %380
        %v383 = vperm.slane %v350, 0
        %v384 = vmul.f32 %v353, %v383
        %v385 = vmul.f32 %v357, %v383
        %v386 = vmul.f32 %v361, %v383
        %v387 = vmul.f32 %v365, %v383
        %v388 = vmul.f32 %v369, %v383
        %v389 = vmul.f32 %v373, %v383
        %v390 = vmul.f32 %v377, %v383
        %v391 = vmul.f32 %v381, %v383
        %v392 = vadd.f32 %v342, %v384
        %v393 = vadd.f32 %v343, %v385
        %v394 = vadd.f32 %v344, %v386
        %v395 = vadd.f32 %v345, %v387
        %v396 = vadd.f32 %v346, %v388
        %v397 = vadd.f32 %v347, %v389
        %v398 = vadd.f32 %v348, %v390
        %v399 = vadd.f32 %v349, %v391
        %v400 = vld [vmem:[%s1 + $0x2] sm:$0x1]
        %401 = vset.pattern.permute.xlu0 2
        %402 = vperm.xlu0 %401, %v280
        %v403 = vpop.permute.xlu0 %402
        %405 = vset.pattern.permute.xlu0 2
        %406 = vperm.xlu0 %405, %v281
        %v407 = vpop.permute.xlu0 %406
        %409 = vset.pattern.permute.xlu0 2
        %410 = vperm.xlu0 %409, %v282
        %v411 = vpop.permute.xlu0 %410
        %413 = vset.pattern.permute.xlu0 2
        %414 = vperm.xlu0 %413, %v283
        %v415 = vpop.permute.xlu0 %414
        %417 = vset.pattern.permute.xlu0 2
        %418 = vperm.xlu0 %417, %v284
        %v419 = vpop.permute.xlu0 %418
        %421 = vset.pattern.permute.xlu0 2
        %422 = vperm.xlu0 %421, %v285
        %v423 = vpop.permute.xlu0 %422
        %425 = vset.pattern.permute.xlu0 2
        %426 = vperm.xlu0 %425, %v286
        %v427 = vpop.permute.xlu0 %426
        %429 = vset.pattern.permute.xlu0 2
        %430 = vperm.xlu0 %429, %v287
        %v431 = vpop.permute.xlu0 %430
        %v433 = vperm.slane %v400, 0
        %v434 = vmul.f32 %v403, %v433
        %v435 = vmul.f32 %v407, %v433
        %v436 = vmul.f32 %v411, %v433
        %v437 = vmul.f32 %v415, %v433
        %v438 = vmul.f32 %v419, %v433
        %v439 = vmul.f32 %v423, %v433
        %v440 = vmul.f32 %v427, %v433
        %v441 = vmul.f32 %v431, %v433
        %v442 = vadd.f32 %v392, %v434
        %v443 = vadd.f32 %v393, %v435
        %v444 = vadd.f32 %v394, %v436
        %v445 = vadd.f32 %v395, %v437
        %v446 = vadd.f32 %v396, %v438
        %v447 = vadd.f32 %v397, %v439
        %v448 = vadd.f32 %v398, %v440
        %v449 = vadd.f32 %v399, %v441
        %v450 = vand.u32 2147483647, %v442
        %vm451 = vcmp.le.f32.partialorder %v450, 0.7853982
        %vm452 = vcmp.lt.s32.totalorder %v442, 0
        %v453 = vand.u32 %v442, 2139095040
        %v454 = vshrl.u32 %v453, 23
        %v455 = vsub.s32 %v454, 127
        %v456 = vand.u32 2147483647, %v442
        %v457 = vand.u32 %v456, 8388607
        %v458 = vor.u32 %v457, 8388608
        %v459 = vsub.s32 0, %v458
        %v460 = vadd.s32 %v455, 1
        %vm461 = vcmp.gt.s32.totalorder %v460, 0
        %v462 = vsel %vm461, %v460, 0
        %v463 = vshrl.u32 %v462, 5
        %v464 = vand.u32 %v462, 31
        %v465 = vsub.s32 32, %v464
        %v466 = vshrl.u32 683565275, %v465
        %v467 = vshll.u32 683565275, %v464
        %v468 = vshrl.u32 2475754826, %v465
        %v469 = vor.u32 %v467, %v468
        %v470 = vshll.u32 2475754826, %v464
        %v471 = vshrl.u32 2131351028, %v465
        %v472 = vor.u32 %v470, %v471
        %v473 = vshll.u32 2131351028, %v464
        %v474 = vshrl.u32 2102212464, %v465
        %v475 = vor.u32 %v473, %v474
        %v476 = vshll.u32 2102212464, %v464
        %v477 = vshrl.u32 920167782, %v465
        %v478 = vor.u32 %v476, %v477
        %v479 = vshll.u32 920167782, %v464
        %v480 = vshrl.u32 1326507024, %v465
        %v481 = vor.u32 %v479, %v480
        %vm482 = vcmp.lt.s32.totalorder %v463, 1
        %vm483 = vcmp.lt.s32.totalorder %v463, 2
        %vm484 = vcmp.lt.s32.totalorder %v463, 3
        %vm485 = vcmp.lt.s32.totalorder %v463, 4
        %v486 = vsel %vm482, %v466, %v469
        %v487 = vsel %vm485, %v475, 2102212464
        %v488 = vsel %vm484, %v472, %v487
        %v489 = vsel %vm483, %v486, %v488
        %v490 = vsel %vm482, %v469, %v472
        %v491 = vsel %vm485, %v478, 920167782
        %v492 = vsel %vm484, %v475, %v491
        %v493 = vsel %vm483, %v490, %v492
        %v494 = vsel %vm482, %v472, %v475
        %v495 = vsel %vm485, %v481, 1326507024
        %v496 = vsel %vm484, %v478, %v495
        %v497 = vsel %vm483, %v494, %v496
        %v498 = vshll.u32 %v458, 8
        %v499 = vand.u32 %v498, 65535
        %v500 = vshrl.u32 %v498, 16
        %v501 = vand.u32 %v497, 65535
        %v502 = vshrl.u32 %v497, 16
        %v503 = vmul.u32 %v499, %v501
        %v504 = vmul.u32 %v499, %v502
        %v505 = vmul.u32 %v500, %v501
        %v506 = vmul.u32 %v500, %v502
        %v507 = vshll.u32 %v504, 16
        %v508 = vshrl.u32 %v504, 16
        %v509 = vshll.u32 %v505, 16
        %v510 = vshrl.u32 %v505, 16
        %vm511 = vc.u32 %v503, %v507
        %v512 = vsel %vm511, 1, 0
        %v513 = vadd.s32 %v503, %v507
        %v514 = vadd.s32 %v506, %v512
        %vm515 = vc.u32 %v513, %v509
        %v516 = vsel %vm515, 1, 0
        %v517 = vadd.s32 %v513, %v509
        %v518 = vadd.s32 %v514, %v516
        %v519 = vadd.s32 %v518, %v508
        %v520 = vadd.s32 %v519, %v510
        %v521 = vand.u32 %v498, 65535
        %v522 = vshrl.u32 %v498, 16
        %v523 = vand.u32 %v493, 65535
        %v524 = vshrl.u32 %v493, 16
        %v525 = vmul.u32 %v521, %v523
        %v526 = vmul.u32 %v521, %v524
        %v527 = vmul.u32 %v522, %v523
        %v528 = vmul.u32 %v522, %v524
        %v529 = vshll.u32 %v526, 16
        %v530 = vshrl.u32 %v526, 16
        %v531 = vshll.u32 %v527, 16
        %v532 = vshrl.u32 %v527, 16
        %vm533 = vc.u32 %v525, %v529
        %v534 = vsel %vm533, 1, 0
        %v535 = vadd.s32 %v525, %v529
        %v536 = vadd.s32 %v528, %v534
        %vm537 = vc.u32 %v535, %v531
        %v538 = vsel %vm537, 1, 0
        %v539 = vadd.s32 %v535, %v531
        %v540 = vadd.s32 %v536, %v538
        %v541 = vadd.s32 %v540, %v530
        %v542 = vadd.s32 %v541, %v532
        %v543 = vmul.u32 %v498, %v489
        %v544 = vadd.s32 %v520, %v539
        %vm545 = vc.u32 %v520, %v539
        %v546 = vadd.s32 %v542, 1
        %v547 = vsel %vm545, %v546, %v542
        %v548 = vadd.s32 %v543, %v547
        %v549 = vadd.s32 %v548, 536870912
        %v550 = vshrl.u32 %v549, 30
        %v551 = vshll.u32 %v550, 30
        %v552 = vsub.s32 %v548, %v551
        %vm553 = vcmp.lt.s32.totalorder %v552, 0
        %v554 = vsub.s32 0, %v552
        %v555 = vsel %vm553, %v554, %v552
        %v556 = vclz %v555
        %v557 = vsub.s32 %v556, 2
        %vm558 = vcmp.gt.s32.totalorder 0, %v557
        %v559 = vsel %vm558, 0, %v557
        %v560 = vsub.s32 32, %v559
        %v561 = vshll.u32 %v552, %v559
        %v562 = vshrl.u32 %v544, %v560
        %v563 = vor.u32 %v561, %v562
        %v564 = vsub.s32 4294967266, %v559
        %v565 = vadd.s32 %v564, 127
        %v566 = vshll.u32 %v565, 23
        %v567 = vor.u32 4788187, %v566
        %v568 = vand.u32 2147483647, %v567
        %v570 = vcvt.s32.f32 %v563
        %v571 = vmul.f32 %v570, %v568
        %v572 = vxor.u32 %v571, 2147483648
        %v573 = vsel %vm452, %v572, %v571
        %v574 = vsub.s32 4, %v550
        %v575 = vsel %vm452, %v574, %v550
        %v576 = vsel %vm451, %v442, %v573
        %v577 = vsel %vm451, 0, %v575
        %v578 = vmul.f32 %v576, %v576
        %v579 = vmul.f32 %v578, -0.001358992
        %v580 = vadd.f32 %v579, 0.041655596
        %v581 = vmul.f32 %v578, %v580
        %v582 = vadd.f32 %v581, -0.4999988
        %v583 = vmul.f32 %v578, %v582
        %v584 = vadd.f32 1.0, %v583
        %v585 = vmul.f32 %v576, %v576
        %v586 = vmul.f32 %v585, -0.00019511016
        %v587 = vadd.f32 %v586, 0.008332121
        %v588 = vmul.f32 %v585, %v587
        %v589 = vadd.f32 %v588, -0.16666654
        %v590 = vmul.f32 %v585, %v589
        %v591 = vadd.f32 %v590, 1.0
        %v592 = vmul.f32 %v591, %v576
        %vm593 = vweird.f32 %v442
        %v594 = vadd.s32 %v577, 3
        %v595 = vand.u32 %v594, 3
        %vm596 = vcmp.lt.s32.totalorder %v595, 2
        %vm597 = vcmp.eq.s32.totalorder %v595, 0
        %v598 = vxor.u32 %v592, 2147483648
        %v599 = vsel %vm597, %v584, %v598
        %vm600 = vcmp.eq.s32.totalorder %v595, 2
        %v601 = vxor.u32 %v584, 2147483648
        %v602 = vsel %vm600, %v601, %v592
        %v603 = vsel %vm596, %v599, %v602
        %v604 = vsel %vm593, nan, %v603
        %v605 = vand.u32 2147483647, %v443
        %vm606 = vcmp.le.f32.partialorder %v605, 0.7853982
        %vm607 = vcmp.lt.s32.totalorder %v443, 0
        %v608 = vand.u32 %v443, 2139095040
        %v609 = vshrl.u32 %v608, 23
        %v610 = vsub.s32 %v609, 127
        %v611 = vand.u32 2147483647, %v443
        %v612 = vand.u32 %v611, 8388607
        %v613 = vor.u32 %v612, 8388608
        %v614 = vsub.s32 0, %v613
        %v615 = vadd.s32 %v610, 1
        %vm616 = vcmp.gt.s32.totalorder %v615, 0
        %v617 = vsel %vm616, %v615, 0
        %v618 = vshrl.u32 %v617, 5
        %v619 = vand.u32 %v617, 31
        %v620 = vsub.s32 32, %v619
        %v621 = vshrl.u32 683565275, %v620
        %v622 = vshll.u32 683565275, %v619
        %v623 = vshrl.u32 2475754826, %v620
        %v624 = vor.u32 %v622, %v623
        %v625 = vshll.u32 2475754826, %v619
        %v626 = vshrl.u32 2131351028, %v620
        %v627 = vor.u32 %v625, %v626
        %v628 = vshll.u32 2131351028, %v619
        %v629 = vshrl.u32 2102212464, %v620
        %v630 = vor.u32 %v628, %v629
        %v631 = vshll.u32 2102212464, %v619
        %v632 = vshrl.u32 920167782, %v620
        %v633 = vor.u32 %v631, %v632
        %v634 = vshll.u32 920167782, %v619
        %v635 = vshrl.u32 1326507024, %v620
        %v636 = vor.u32 %v634, %v635
        %vm637 = vcmp.lt.s32.totalorder %v618, 1
        %vm638 = vcmp.lt.s32.totalorder %v618, 2
        %vm639 = vcmp.lt.s32.totalorder %v618, 3
        %vm640 = vcmp.lt.s32.totalorder %v618, 4
        %v641 = vsel %vm637, %v621, %v624
        %v642 = vsel %vm640, %v630, 2102212464
        %v643 = vsel %vm639, %v627, %v642
        %v644 = vsel %vm638, %v641, %v643
        %v645 = vsel %vm637, %v624, %v627
        %v646 = vsel %vm640, %v633, 920167782
        %v647 = vsel %vm639, %v630, %v646
        %v648 = vsel %vm638, %v645, %v647
        %v649 = vsel %vm637, %v627, %v630
        %v650 = vsel %vm640, %v636, 1326507024
        %v651 = vsel %vm639, %v633, %v650
        %v652 = vsel %vm638, %v649, %v651
        %v653 = vshll.u32 %v613, 8
        %v654 = vand.u32 %v653, 65535
        %v655 = vshrl.u32 %v653, 16
        %v656 = vand.u32 %v652, 65535
        %v657 = vshrl.u32 %v652, 16
        %v658 = vmul.u32 %v654, %v656
        %v659 = vmul.u32 %v654, %v657
        %v660 = vmul.u32 %v655, %v656
        %v661 = vmul.u32 %v655, %v657
        %v662 = vshll.u32 %v659, 16
        %v663 = vshrl.u32 %v659, 16
        %v664 = vshll.u32 %v660, 16
        %v665 = vshrl.u32 %v660, 16
        %vm666 = vc.u32 %v658, %v662
        %v667 = vsel %vm666, 1, 0
        %v668 = vadd.s32 %v658, %v662
        %v669 = vadd.s32 %v661, %v667
        %vm670 = vc.u32 %v668, %v664
        %v671 = vsel %vm670, 1, 0
        %v672 = vadd.s32 %v668, %v664
        %v673 = vadd.s32 %v669, %v671
        %v674 = vadd.s32 %v673, %v663
        %v675 = vadd.s32 %v674, %v665
        %v676 = vand.u32 %v653, 65535
        %v677 = vshrl.u32 %v653, 16
        %v678 = vand.u32 %v648, 65535
        %v679 = vshrl.u32 %v648, 16
        %v680 = vmul.u32 %v676, %v678
        %v681 = vmul.u32 %v676, %v679
        %v682 = vmul.u32 %v677, %v678
        %v683 = vmul.u32 %v677, %v679
        %v684 = vshll.u32 %v681, 16
        %v685 = vshrl.u32 %v681, 16
        %v686 = vshll.u32 %v682, 16
        %v687 = vshrl.u32 %v682, 16
        %vm688 = vc.u32 %v680, %v684
        %v689 = vsel %vm688, 1, 0
        %v690 = vadd.s32 %v680, %v684
        %v691 = vadd.s32 %v683, %v689
        %vm692 = vc.u32 %v690, %v686
        %v693 = vsel %vm692, 1, 0
        %v694 = vadd.s32 %v690, %v686
        %v695 = vadd.s32 %v691, %v693
        %v696 = vadd.s32 %v695, %v685
        %v697 = vadd.s32 %v696, %v687
        %v698 = vmul.u32 %v653, %v644
        %v699 = vadd.s32 %v675, %v694
        %vm700 = vc.u32 %v675, %v694
        %v701 = vadd.s32 %v697, 1
        %v702 = vsel %vm700, %v701, %v697
        %v703 = vadd.s32 %v698, %v702
        %v704 = vadd.s32 %v703, 536870912
        %v705 = vshrl.u32 %v704, 30
        %v706 = vshll.u32 %v705, 30
        %v707 = vsub.s32 %v703, %v706
        %vm708 = vcmp.lt.s32.totalorder %v707, 0
        %v709 = vsub.s32 0, %v707
        %v710 = vsel %vm708, %v709, %v707
        %v711 = vclz %v710
        %v712 = vsub.s32 %v711, 2
        %vm713 = vcmp.gt.s32.totalorder 0, %v712
        %v714 = vsel %vm713, 0, %v712
        %v715 = vsub.s32 32, %v714
        %v716 = vshll.u32 %v707, %v714
        %v717 = vshrl.u32 %v699, %v715
        %v718 = vor.u32 %v716, %v717
        %v719 = vsub.s32 4294967266, %v714
        %v720 = vadd.s32 %v719, 127
        %v721 = vshll.u32 %v720, 23
        %v722 = vor.u32 4788187, %v721
        %v723 = vand.u32 2147483647, %v722
        %v725 = vcvt.s32.f32 %v718
        %v726 = vmul.f32 %v725, %v723
        %v727 = vxor.u32 %v726, 2147483648
        %v728 = vsel %vm607, %v727, %v726
        %v729 = vsub.s32 4, %v705
        %v730 = vsel %vm607, %v729, %v705
        %v731 = vsel %vm606, %v443, %v728
        %v732 = vsel %vm606, 0, %v730
        %v733 = vmul.f32 %v731, %v731
        %v734 = vmul.f32 %v733, -0.001358992
        %v735 = vadd.f32 %v734, 0.041655596
        %v736 = vmul.f32 %v733, %v735
        %v737 = vadd.f32 %v736, -0.4999988
        %v738 = vmul.f32 %v733, %v737
        %v739 = vadd.f32 1.0, %v738
        %v740 = vmul.f32 %v731, %v731
        %v741 = vmul.f32 %v740, -0.00019511016
        %v742 = vadd.f32 %v741, 0.008332121
        %v743 = vmul.f32 %v740, %v742
        %v744 = vadd.f32 %v743, -0.16666654
        %v745 = vmul.f32 %v740, %v744
        %v746 = vadd.f32 %v745, 1.0
        %v747 = vmul.f32 %v746, %v731
        %vm748 = vweird.f32 %v443
        %v749 = vadd.s32 %v732, 3
        %v750 = vand.u32 %v749, 3
        %vm751 = vcmp.lt.s32.totalorder %v750, 2
        %vm752 = vcmp.eq.s32.totalorder %v750, 0
        %v753 = vxor.u32 %v747, 2147483648
        %v754 = vsel %vm752, %v739, %v753
        %vm755 = vcmp.eq.s32.totalorder %v750, 2
        %v756 = vxor.u32 %v739, 2147483648
        %v757 = vsel %vm755, %v756, %v747
        %v758 = vsel %vm751, %v754, %v757
        %v759 = vsel %vm748, nan, %v758
        %v760 = vand.u32 2147483647, %v444
        %vm761 = vcmp.le.f32.partialorder %v760, 0.7853982
        %vm762 = vcmp.lt.s32.totalorder %v444, 0
        %v763 = vand.u32 %v444, 2139095040
        %v764 = vshrl.u32 %v763, 23
        %v765 = vsub.s32 %v764, 127
        %v766 = vand.u32 2147483647, %v444
        %v767 = vand.u32 %v766, 8388607
        %v768 = vor.u32 %v767, 8388608
        %v769 = vsub.s32 0, %v768
        %v770 = vadd.s32 %v765, 1
        %vm771 = vcmp.gt.s32.totalorder %v770, 0
        %v772 = vsel %vm771, %v770, 0
        %v773 = vshrl.u32 %v772, 5
        %v774 = vand.u32 %v772, 31
        %v775 = vsub.s32 32, %v774
        %v776 = vshrl.u32 683565275, %v775
        %v777 = vshll.u32 683565275, %v774
        %v778 = vshrl.u32 2475754826, %v775
        %v779 = vor.u32 %v777, %v778
        %v780 = vshll.u32 2475754826, %v774
        %v781 = vshrl.u32 2131351028, %v775
        %v782 = vor.u32 %v780, %v781
        %v783 = vshll.u32 2131351028, %v774
        %v784 = vshrl.u32 2102212464, %v775
        %v785 = vor.u32 %v783, %v784
        %v786 = vshll.u32 2102212464, %v774
        %v787 = vshrl.u32 920167782, %v775
        %v788 = vor.u32 %v786, %v787
        %v789 = vshll.u32 920167782, %v774
        %v790 = vshrl.u32 1326507024, %v775
        %v791 = vor.u32 %v789, %v790
        %vm792 = vcmp.lt.s32.totalorder %v773, 1
        %vm793 = vcmp.lt.s32.totalorder %v773, 2
        %vm794 = vcmp.lt.s32.totalorder %v773, 3
        %vm795 = vcmp.lt.s32.totalorder %v773, 4
        %v796 = vsel %vm792, %v776, %v779
        %v797 = vsel %vm795, %v785, 2102212464
        %v798 = vsel %vm794, %v782, %v797
        %v799 = vsel %vm793, %v796, %v798
        %v800 = vsel %vm792, %v779, %v782
        %v801 = vsel %vm795, %v788, 920167782
        %v802 = vsel %vm794, %v785, %v801
        %v803 = vsel %vm793, %v800, %v802
        %v804 = vsel %vm792, %v782, %v785
        %v805 = vsel %vm795, %v791, 1326507024
        %v806 = vsel %vm794, %v788, %v805
        %v807 = vsel %vm793, %v804, %v806
        %v808 = vshll.u32 %v768, 8
        %v809 = vand.u32 %v808, 65535
        %v810 = vshrl.u32 %v808, 16
        %v811 = vand.u32 %v807, 65535
        %v812 = vshrl.u32 %v807, 16
        %v813 = vmul.u32 %v809, %v811
        %v814 = vmul.u32 %v809, %v812
        %v815 = vmul.u32 %v810, %v811
        %v816 = vmul.u32 %v810, %v812
        %v817 = vshll.u32 %v814, 16
        %v818 = vshrl.u32 %v814, 16
        %v819 = vshll.u32 %v815, 16
        %v820 = vshrl.u32 %v815, 16
        %vm821 = vc.u32 %v813, %v817
        %v822 = vsel %vm821, 1, 0
        %v823 = vadd.s32 %v813, %v817
        %v824 = vadd.s32 %v816, %v822
        %vm825 = vc.u32 %v823, %v819
        %v826 = vsel %vm825, 1, 0
        %v827 = vadd.s32 %v823, %v819
        %v828 = vadd.s32 %v824, %v826
        %v829 = vadd.s32 %v828, %v818
        %v830 = vadd.s32 %v829, %v820
        %v831 = vand.u32 %v808, 65535
        %v832 = vshrl.u32 %v808, 16
        %v833 = vand.u32 %v803, 65535
        %v834 = vshrl.u32 %v803, 16
        %v835 = vmul.u32 %v831, %v833
        %v836 = vmul.u32 %v831, %v834
        %v837 = vmul.u32 %v832, %v833
        %v838 = vmul.u32 %v832, %v834
        %v839 = vshll.u32 %v836, 16
        %v840 = vshrl.u32 %v836, 16
        %v841 = vshll.u32 %v837, 16
        %v842 = vshrl.u32 %v837, 16
        %vm843 = vc.u32 %v835, %v839
        %v844 = vsel %vm843, 1, 0
        %v845 = vadd.s32 %v835, %v839
        %v846 = vadd.s32 %v838, %v844
        %vm847 = vc.u32 %v845, %v841
        %v848 = vsel %vm847, 1, 0
        %v849 = vadd.s32 %v845, %v841
        %v850 = vadd.s32 %v846, %v848
        %v851 = vadd.s32 %v850, %v840
        %v852 = vadd.s32 %v851, %v842
        %v853 = vmul.u32 %v808, %v799
        %v854 = vadd.s32 %v830, %v849
        %vm855 = vc.u32 %v830, %v849
        %v856 = vadd.s32 %v852, 1
        %v857 = vsel %vm855, %v856, %v852
        %v858 = vadd.s32 %v853, %v857
        %v859 = vadd.s32 %v858, 536870912
        %v860 = vshrl.u32 %v859, 30
        %v861 = vshll.u32 %v860, 30
        %v862 = vsub.s32 %v858, %v861
        %vm863 = vcmp.lt.s32.totalorder %v862, 0
        %v864 = vsub.s32 0, %v862
        %v865 = vsel %vm863, %v864, %v862
        %v866 = vclz %v865
        %v867 = vsub.s32 %v866, 2
        %vm868 = vcmp.gt.s32.totalorder 0, %v867
        %v869 = vsel %vm868, 0, %v867
        %v870 = vsub.s32 32, %v869
        %v871 = vshll.u32 %v862, %v869
        %v872 = vshrl.u32 %v854, %v870
        %v873 = vor.u32 %v871, %v872
        %v874 = vsub.s32 4294967266, %v869
        %v875 = vadd.s32 %v874, 127
        %v876 = vshll.u32 %v875, 23
        %v877 = vor.u32 4788187, %v876
        %v878 = vand.u32 2147483647, %v877
        %v880 = vcvt.s32.f32 %v873
        %v881 = vmul.f32 %v880, %v878
        %v882 = vxor.u32 %v881, 2147483648
        %v883 = vsel %vm762, %v882, %v881
        %v884 = vsub.s32 4, %v860
        %v885 = vsel %vm762, %v884, %v860
        %v886 = vsel %vm761, %v444, %v883
        %v887 = vsel %vm761, 0, %v885
        %v888 = vmul.f32 %v886, %v886
        %v889 = vmul.f32 %v888, -0.001358992
        %v890 = vadd.f32 %v889, 0.041655596
        %v891 = vmul.f32 %v888, %v890
        %v892 = vadd.f32 %v891, -0.4999988
        %v893 = vmul.f32 %v888, %v892
        %v894 = vadd.f32 1.0, %v893
        %v895 = vmul.f32 %v886, %v886
        %v896 = vmul.f32 %v895, -0.00019511016
        %v897 = vadd.f32 %v896, 0.008332121
        %v898 = vmul.f32 %v895, %v897
        %v899 = vadd.f32 %v898, -0.16666654
        %v900 = vmul.f32 %v895, %v899
        %v901 = vadd.f32 %v900, 1.0
        %v902 = vmul.f32 %v901, %v886
        %vm903 = vweird.f32 %v444
        %v904 = vadd.s32 %v887, 3
        %v905 = vand.u32 %v904, 3
        %vm906 = vcmp.lt.s32.totalorder %v905, 2
        %vm907 = vcmp.eq.s32.totalorder %v905, 0
        %v908 = vxor.u32 %v902, 2147483648
        %v909 = vsel %vm907, %v894, %v908
        %vm910 = vcmp.eq.s32.totalorder %v905, 2
        %v911 = vxor.u32 %v894, 2147483648
        %v912 = vsel %vm910, %v911, %v902
        %v913 = vsel %vm906, %v909, %v912
        %v914 = vsel %vm903, nan, %v913
        %v915 = vand.u32 2147483647, %v445
        %vm916 = vcmp.le.f32.partialorder %v915, 0.7853982
        %vm917 = vcmp.lt.s32.totalorder %v445, 0
        %v918 = vand.u32 %v445, 2139095040
        %v919 = vshrl.u32 %v918, 23
        %v920 = vsub.s32 %v919, 127
        %v921 = vand.u32 2147483647, %v445
        %v922 = vand.u32 %v921, 8388607
        %v923 = vor.u32 %v922, 8388608
        %v924 = vsub.s32 0, %v923
        %v925 = vadd.s32 %v920, 1
        %vm926 = vcmp.gt.s32.totalorder %v925, 0
        %v927 = vsel %vm926, %v925, 0
        %v928 = vshrl.u32 %v927, 5
        %v929 = vand.u32 %v927, 31
        %v930 = vsub.s32 32, %v929
        %v931 = vshrl.u32 683565275, %v930
        %v932 = vshll.u32 683565275, %v929
        %v933 = vshrl.u32 2475754826, %v930
        %v934 = vor.u32 %v932, %v933
        %v935 = vshll.u32 2475754826, %v929
        %v936 = vshrl.u32 2131351028, %v930
        %v937 = vor.u32 %v935, %v936
        %v938 = vshll.u32 2131351028, %v929
        %v939 = vshrl.u32 2102212464, %v930
        %v940 = vor.u32 %v938, %v939
        %v941 = vshll.u32 2102212464, %v929
        %v942 = vshrl.u32 920167782, %v930
        %v943 = vor.u32 %v941, %v942
        %v944 = vshll.u32 920167782, %v929
        %v945 = vshrl.u32 1326507024, %v930
        %v946 = vor.u32 %v944, %v945
        %vm947 = vcmp.lt.s32.totalorder %v928, 1
        %vm948 = vcmp.lt.s32.totalorder %v928, 2
        %vm949 = vcmp.lt.s32.totalorder %v928, 3
        %vm950 = vcmp.lt.s32.totalorder %v928, 4
        %v951 = vsel %vm947, %v931, %v934
        %v952 = vsel %vm950, %v940, 2102212464
        %v953 = vsel %vm949, %v937, %v952
        %v954 = vsel %vm948, %v951, %v953
        %v955 = vsel %vm947, %v934, %v937
        %v956 = vsel %vm950, %v943, 920167782
        %v957 = vsel %vm949, %v940, %v956
        %v958 = vsel %vm948, %v955, %v957
        %v959 = vsel %vm947, %v937, %v940
        %v960 = vsel %vm950, %v946, 1326507024
        %v961 = vsel %vm949, %v943, %v960
        %v962 = vsel %vm948, %v959, %v961
        %v963 = vshll.u32 %v923, 8
        %v964 = vand.u32 %v963, 65535
        %v965 = vshrl.u32 %v963, 16
        %v966 = vand.u32 %v962, 65535
        %v967 = vshrl.u32 %v962, 16
        %v968 = vmul.u32 %v964, %v966
        %v969 = vmul.u32 %v964, %v967
        %v970 = vmul.u32 %v965, %v966
        %v971 = vmul.u32 %v965, %v967
        %v972 = vshll.u32 %v969, 16
        %v973 = vshrl.u32 %v969, 16
        %v974 = vshll.u32 %v970, 16
        %v975 = vshrl.u32 %v970, 16
        %vm976 = vc.u32 %v968, %v972
        %v977 = vsel %vm976, 1, 0
        %v978 = vadd.s32 %v968, %v972
        %v979 = vadd.s32 %v971, %v977
        %vm980 = vc.u32 %v978, %v974
        %v981 = vsel %vm980, 1, 0
        %v982 = vadd.s32 %v978, %v974
        %v983 = vadd.s32 %v979, %v981
        %v984 = vadd.s32 %v983, %v973
        %v985 = vadd.s32 %v984, %v975
        %v986 = vand.u32 %v963, 65535
        %v987 = vshrl.u32 %v963, 16
        %v988 = vand.u32 %v958, 65535
        %v989 = vshrl.u32 %v958, 16
        %v990 = vmul.u32 %v986, %v988
        %v991 = vmul.u32 %v986, %v989
        %v992 = vmul.u32 %v987, %v988
        %v993 = vmul.u32 %v987, %v989
        %v994 = vshll.u32 %v991, 16
        %v995 = vshrl.u32 %v991, 16
        %v996 = vshll.u32 %v992, 16
        %v997 = vshrl.u32 %v992, 16
        %vm998 = vc.u32 %v990, %v994
        %v999 = vsel %vm998, 1, 0
        %v1000 = vadd.s32 %v990, %v994
        %v1001 = vadd.s32 %v993, %v999
        %vm1002 = vc.u32 %v1000, %v996
        %v1003 = vsel %vm1002, 1, 0
        %v1004 = vadd.s32 %v1000, %v996
        %v1005 = vadd.s32 %v1001, %v1003
        %v1006 = vadd.s32 %v1005, %v995
        %v1007 = vadd.s32 %v1006, %v997
        %v1008 = vmul.u32 %v963, %v954
        %v1009 = vadd.s32 %v985, %v1004
        %vm1010 = vc.u32 %v985, %v1004
        %v1011 = vadd.s32 %v1007, 1
        %v1012 = vsel %vm1010, %v1011, %v1007
        %v1013 = vadd.s32 %v1008, %v1012
        %v1014 = vadd.s32 %v1013, 536870912
        %v1015 = vshrl.u32 %v1014, 30
        %v1016 = vshll.u32 %v1015, 30
        %v1017 = vsub.s32 %v1013, %v1016
        %vm1018 = vcmp.lt.s32.totalorder %v1017, 0
        %v1019 = vsub.s32 0, %v1017
        %v1020 = vsel %vm1018, %v1019, %v1017
        %v1021 = vclz %v1020
        %v1022 = vsub.s32 %v1021, 2
        %vm1023 = vcmp.gt.s32.totalorder 0, %v1022
        %v1024 = vsel %vm1023, 0, %v1022
        %v1025 = vsub.s32 32, %v1024
        %v1026 = vshll.u32 %v1017, %v1024
        %v1027 = vshrl.u32 %v1009, %v1025
        %v1028 = vor.u32 %v1026, %v1027
        %v1029 = vsub.s32 4294967266, %v1024
        %v1030 = vadd.s32 %v1029, 127
        %v1031 = vshll.u32 %v1030, 23
        %v1032 = vor.u32 4788187, %v1031
        %v1033 = vand.u32 2147483647, %v1032
        %v1035 = vcvt.s32.f32 %v1028
        %v1036 = vmul.f32 %v1035, %v1033
        %v1037 = vxor.u32 %v1036, 2147483648
        %v1038 = vsel %vm917, %v1037, %v1036
        %v1039 = vsub.s32 4, %v1015
        %v1040 = vsel %vm917, %v1039, %v1015
        %v1041 = vsel %vm916, %v445, %v1038
        %v1042 = vsel %vm916, 0, %v1040
        %v1043 = vmul.f32 %v1041, %v1041
        %v1044 = vmul.f32 %v1043, -0.001358992
        %v1045 = vadd.f32 %v1044, 0.041655596
        %v1046 = vmul.f32 %v1043, %v1045
        %v1047 = vadd.f32 %v1046, -0.4999988
        %v1048 = vmul.f32 %v1043, %v1047
        %v1049 = vadd.f32 1.0, %v1048
        %v1050 = vmul.f32 %v1041, %v1041
        %v1051 = vmul.f32 %v1050, -0.00019511016
        %v1052 = vadd.f32 %v1051, 0.008332121
        %v1053 = vmul.f32 %v1050, %v1052
        %v1054 = vadd.f32 %v1053, -0.16666654
        %v1055 = vmul.f32 %v1050, %v1054
        %v1056 = vadd.f32 %v1055, 1.0
        %v1057 = vmul.f32 %v1056, %v1041
        %vm1058 = vweird.f32 %v445
        %v1059 = vadd.s32 %v1042, 3
        %v1060 = vand.u32 %v1059, 3
        %vm1061 = vcmp.lt.s32.totalorder %v1060, 2
        %vm1062 = vcmp.eq.s32.totalorder %v1060, 0
        %v1063 = vxor.u32 %v1057, 2147483648
        %v1064 = vsel %vm1062, %v1049, %v1063
        %vm1065 = vcmp.eq.s32.totalorder %v1060, 2
        %v1066 = vxor.u32 %v1049, 2147483648
        %v1067 = vsel %vm1065, %v1066, %v1057
        %v1068 = vsel %vm1061, %v1064, %v1067
        %v1069 = vsel %vm1058, nan, %v1068
        %v1070 = vand.u32 2147483647, %v446
        %vm1071 = vcmp.le.f32.partialorder %v1070, 0.7853982
        %vm1072 = vcmp.lt.s32.totalorder %v446, 0
        %v1073 = vand.u32 %v446, 2139095040
        %v1074 = vshrl.u32 %v1073, 23
        %v1075 = vsub.s32 %v1074, 127
        %v1076 = vand.u32 2147483647, %v446
        %v1077 = vand.u32 %v1076, 8388607
        %v1078 = vor.u32 %v1077, 8388608
        %v1079 = vsub.s32 0, %v1078
        %v1080 = vadd.s32 %v1075, 1
        %vm1081 = vcmp.gt.s32.totalorder %v1080, 0
        %v1082 = vsel %vm1081, %v1080, 0
        %v1083 = vshrl.u32 %v1082, 5
        %v1084 = vand.u32 %v1082, 31
        %v1085 = vsub.s32 32, %v1084
        %v1086 = vshrl.u32 683565275, %v1085
        %v1087 = vshll.u32 683565275, %v1084
        %v1088 = vshrl.u32 2475754826, %v1085
        %v1089 = vor.u32 %v1087, %v1088
        %v1090 = vshll.u32 2475754826, %v1084
        %v1091 = vshrl.u32 2131351028, %v1085
        %v1092 = vor.u32 %v1090, %v1091
        %v1093 = vshll.u32 2131351028, %v1084
        %v1094 = vshrl.u32 2102212464, %v1085
        %v1095 = vor.u32 %v1093, %v1094
        %v1096 = vshll.u32 2102212464, %v1084
        %v1097 = vshrl.u32 920167782, %v1085
        %v1098 = vor.u32 %v1096, %v1097
        %v1099 = vshll.u32 920167782, %v1084
        %v1100 = vshrl.u32 1326507024, %v1085
        %v1101 = vor.u32 %v1099, %v1100
        %vm1102 = vcmp.lt.s32.totalorder %v1083, 1
        %vm1103 = vcmp.lt.s32.totalorder %v1083, 2
        %vm1104 = vcmp.lt.s32.totalorder %v1083, 3
        %vm1105 = vcmp.lt.s32.totalorder %v1083, 4
        %v1106 = vsel %vm1102, %v1086, %v1089
        %v1107 = vsel %vm1105, %v1095, 2102212464
        %v1108 = vsel %vm1104, %v1092, %v1107
        %v1109 = vsel %vm1103, %v1106, %v1108
        %v1110 = vsel %vm1102, %v1089, %v1092
        %v1111 = vsel %vm1105, %v1098, 920167782
        %v1112 = vsel %vm1104, %v1095, %v1111
        %v1113 = vsel %vm1103, %v1110, %v1112
        %v1114 = vsel %vm1102, %v1092, %v1095
        %v1115 = vsel %vm1105, %v1101, 1326507024
        %v1116 = vsel %vm1104, %v1098, %v1115
        %v1117 = vsel %vm1103, %v1114, %v1116
        %v1118 = vshll.u32 %v1078, 8
        %v1119 = vand.u32 %v1118, 65535
        %v1120 = vshrl.u32 %v1118, 16
        %v1121 = vand.u32 %v1117, 65535
        %v1122 = vshrl.u32 %v1117, 16
        %v1123 = vmul.u32 %v1119, %v1121
        %v1124 = vmul.u32 %v1119, %v1122
        %v1125 = vmul.u32 %v1120, %v1121
        %v1126 = vmul.u32 %v1120, %v1122
        %v1127 = vshll.u32 %v1124, 16
        %v1128 = vshrl.u32 %v1124, 16
        %v1129 = vshll.u32 %v1125, 16
        %v1130 = vshrl.u32 %v1125, 16
        %vm1131 = vc.u32 %v1123, %v1127
        %v1132 = vsel %vm1131, 1, 0
        %v1133 = vadd.s32 %v1123, %v1127
        %v1134 = vadd.s32 %v1126, %v1132
        %vm1135 = vc.u32 %v1133, %v1129
        %v1136 = vsel %vm1135, 1, 0
        %v1137 = vadd.s32 %v1133, %v1129
        %v1138 = vadd.s32 %v1134, %v1136
        %v1139 = vadd.s32 %v1138, %v1128
        %v1140 = vadd.s32 %v1139, %v1130
        %v1141 = vand.u32 %v1118, 65535
        %v1142 = vshrl.u32 %v1118, 16
        %v1143 = vand.u32 %v1113, 65535
        %v1144 = vshrl.u32 %v1113, 16
        %v1145 = vmul.u32 %v1141, %v1143
        %v1146 = vmul.u32 %v1141, %v1144
        %v1147 = vmul.u32 %v1142, %v1143
        %v1148 = vmul.u32 %v1142, %v1144
        %v1149 = vshll.u32 %v1146, 16
        %v1150 = vshrl.u32 %v1146, 16
        %v1151 = vshll.u32 %v1147, 16
        %v1152 = vshrl.u32 %v1147, 16
        %vm1153 = vc.u32 %v1145, %v1149
        %v1154 = vsel %vm1153, 1, 0
        %v1155 = vadd.s32 %v1145, %v1149
        %v1156 = vadd.s32 %v1148, %v1154
        %vm1157 = vc.u32 %v1155, %v1151
        %v1158 = vsel %vm1157, 1, 0
        %v1159 = vadd.s32 %v1155, %v1151
        %v1160 = vadd.s32 %v1156, %v1158
        %v1161 = vadd.s32 %v1160, %v1150
        %v1162 = vadd.s32 %v1161, %v1152
        %v1163 = vmul.u32 %v1118, %v1109
        %v1164 = vadd.s32 %v1140, %v1159
        %vm1165 = vc.u32 %v1140, %v1159
        %v1166 = vadd.s32 %v1162, 1
        %v1167 = vsel %vm1165, %v1166, %v1162
        %v1168 = vadd.s32 %v1163, %v1167
        %v1169 = vadd.s32 %v1168, 536870912
        %v1170 = vshrl.u32 %v1169, 30
        %v1171 = vshll.u32 %v1170, 30
        %v1172 = vsub.s32 %v1168, %v1171
        %vm1173 = vcmp.lt.s32.totalorder %v1172, 0
        %v1174 = vsub.s32 0, %v1172
        %v1175 = vsel %vm1173, %v1174, %v1172
        %v1176 = vclz %v1175
        %v1177 = vsub.s32 %v1176, 2
        %vm1178 = vcmp.gt.s32.totalorder 0, %v1177
        %v1179 = vsel %vm1178, 0, %v1177
        %v1180 = vsub.s32 32, %v1179
        %v1181 = vshll.u32 %v1172, %v1179
        %v1182 = vshrl.u32 %v1164, %v1180
        %v1183 = vor.u32 %v1181, %v1182
        %v1184 = vsub.s32 4294967266, %v1179
        %v1185 = vadd.s32 %v1184, 127
        %v1186 = vshll.u32 %v1185, 23
        %v1187 = vor.u32 4788187, %v1186
        %v1188 = vand.u32 2147483647, %v1187
        %v1190 = vcvt.s32.f32 %v1183
        %v1191 = vmul.f32 %v1190, %v1188
        %v1192 = vxor.u32 %v1191, 2147483648
        %v1193 = vsel %vm1072, %v1192, %v1191
        %v1194 = vsub.s32 4, %v1170
        %v1195 = vsel %vm1072, %v1194, %v1170
        %v1196 = vsel %vm1071, %v446, %v1193
        %v1197 = vsel %vm1071, 0, %v1195
        %v1198 = vmul.f32 %v1196, %v1196
        %v1199 = vmul.f32 %v1198, -0.001358992
        %v1200 = vadd.f32 %v1199, 0.041655596
        %v1201 = vmul.f32 %v1198, %v1200
        %v1202 = vadd.f32 %v1201, -0.4999988
        %v1203 = vmul.f32 %v1198, %v1202
        %v1204 = vadd.f32 1.0, %v1203
        %v1205 = vmul.f32 %v1196, %v1196
        %v1206 = vmul.f32 %v1205, -0.00019511016
        %v1207 = vadd.f32 %v1206, 0.008332121
        %v1208 = vmul.f32 %v1205, %v1207
        %v1209 = vadd.f32 %v1208, -0.16666654
        %v1210 = vmul.f32 %v1205, %v1209
        %v1211 = vadd.f32 %v1210, 1.0
        %v1212 = vmul.f32 %v1211, %v1196
        %vm1213 = vweird.f32 %v446
        %v1214 = vadd.s32 %v1197, 3
        %v1215 = vand.u32 %v1214, 3
        %vm1216 = vcmp.lt.s32.totalorder %v1215, 2
        %vm1217 = vcmp.eq.s32.totalorder %v1215, 0
        %v1218 = vxor.u32 %v1212, 2147483648
        %v1219 = vsel %vm1217, %v1204, %v1218
        %vm1220 = vcmp.eq.s32.totalorder %v1215, 2
        %v1221 = vxor.u32 %v1204, 2147483648
        %v1222 = vsel %vm1220, %v1221, %v1212
        %v1223 = vsel %vm1216, %v1219, %v1222
        %v1224 = vsel %vm1213, nan, %v1223
        %v1225 = vand.u32 2147483647, %v447
        %vm1226 = vcmp.le.f32.partialorder %v1225, 0.7853982
        %vm1227 = vcmp.lt.s32.totalorder %v447, 0
        %v1228 = vand.u32 %v447, 2139095040
        %v1229 = vshrl.u32 %v1228, 23
        %v1230 = vsub.s32 %v1229, 127
        %v1231 = vand.u32 2147483647, %v447
        %v1232 = vand.u32 %v1231, 8388607
        %v1233 = vor.u32 %v1232, 8388608
        %v1234 = vsub.s32 0, %v1233
        %v1235 = vadd.s32 %v1230, 1
        %vm1236 = vcmp.gt.s32.totalorder %v1235, 0
        %v1237 = vsel %vm1236, %v1235, 0
        %v1238 = vshrl.u32 %v1237, 5
        %v1239 = vand.u32 %v1237, 31
        %v1240 = vsub.s32 32, %v1239
        %v1241 = vshrl.u32 683565275, %v1240
        %v1242 = vshll.u32 683565275, %v1239
        %v1243 = vshrl.u32 2475754826, %v1240
        %v1244 = vor.u32 %v1242, %v1243
        %v1245 = vshll.u32 2475754826, %v1239
        %v1246 = vshrl.u32 2131351028, %v1240
        %v1247 = vor.u32 %v1245, %v1246
        %v1248 = vshll.u32 2131351028, %v1239
        %v1249 = vshrl.u32 2102212464, %v1240
        %v1250 = vor.u32 %v1248, %v1249
        %v1251 = vshll.u32 2102212464, %v1239
        %v1252 = vshrl.u32 920167782, %v1240
        %v1253 = vor.u32 %v1251, %v1252
        %v1254 = vshll.u32 920167782, %v1239
        %v1255 = vshrl.u32 1326507024, %v1240
        %v1256 = vor.u32 %v1254, %v1255
        %vm1257 = vcmp.lt.s32.totalorder %v1238, 1
        %vm1258 = vcmp.lt.s32.totalorder %v1238, 2
        %vm1259 = vcmp.lt.s32.totalorder %v1238, 3
        %vm1260 = vcmp.lt.s32.totalorder %v1238, 4
        %v1261 = vsel %vm1257, %v1241, %v1244
        %v1262 = vsel %vm1260, %v1250, 2102212464
        %v1263 = vsel %vm1259, %v1247, %v1262
        %v1264 = vsel %vm1258, %v1261, %v1263
        %v1265 = vsel %vm1257, %v1244, %v1247
        %v1266 = vsel %vm1260, %v1253, 920167782
        %v1267 = vsel %vm1259, %v1250, %v1266
        %v1268 = vsel %vm1258, %v1265, %v1267
        %v1269 = vsel %vm1257, %v1247, %v1250
        %v1270 = vsel %vm1260, %v1256, 1326507024
        %v1271 = vsel %vm1259, %v1253, %v1270
        %v1272 = vsel %vm1258, %v1269, %v1271
        %v1273 = vshll.u32 %v1233, 8
        %v1274 = vand.u32 %v1273, 65535
        %v1275 = vshrl.u32 %v1273, 16
        %v1276 = vand.u32 %v1272, 65535
        %v1277 = vshrl.u32 %v1272, 16
        %v1278 = vmul.u32 %v1274, %v1276
        %v1279 = vmul.u32 %v1274, %v1277
        %v1280 = vmul.u32 %v1275, %v1276
        %v1281 = vmul.u32 %v1275, %v1277
        %v1282 = vshll.u32 %v1279, 16
        %v1283 = vshrl.u32 %v1279, 16
        %v1284 = vshll.u32 %v1280, 16
        %v1285 = vshrl.u32 %v1280, 16
        %vm1286 = vc.u32 %v1278, %v1282
        %v1287 = vsel %vm1286, 1, 0
        %v1288 = vadd.s32 %v1278, %v1282
        %v1289 = vadd.s32 %v1281, %v1287
        %vm1290 = vc.u32 %v1288, %v1284
        %v1291 = vsel %vm1290, 1, 0
        %v1292 = vadd.s32 %v1288, %v1284
        %v1293 = vadd.s32 %v1289, %v1291
        %v1294 = vadd.s32 %v1293, %v1283
        %v1295 = vadd.s32 %v1294, %v1285
        %v1296 = vand.u32 %v1273, 65535
        %v1297 = vshrl.u32 %v1273, 16
        %v1298 = vand.u32 %v1268, 65535
        %v1299 = vshrl.u32 %v1268, 16
        %v1300 = vmul.u32 %v1296, %v1298
        %v1301 = vmul.u32 %v1296, %v1299
        %v1302 = vmul.u32 %v1297, %v1298
        %v1303 = vmul.u32 %v1297, %v1299
        %v1304 = vshll.u32 %v1301, 16
        %v1305 = vshrl.u32 %v1301, 16
        %v1306 = vshll.u32 %v1302, 16
        %v1307 = vshrl.u32 %v1302, 16
        %vm1308 = vc.u32 %v1300, %v1304
        %v1309 = vsel %vm1308, 1, 0
        %v1310 = vadd.s32 %v1300, %v1304
        %v1311 = vadd.s32 %v1303, %v1309
        %vm1312 = vc.u32 %v1310, %v1306
        %v1313 = vsel %vm1312, 1, 0
        %v1314 = vadd.s32 %v1310, %v1306
        %v1315 = vadd.s32 %v1311, %v1313
        %v1316 = vadd.s32 %v1315, %v1305
        %v1317 = vadd.s32 %v1316, %v1307
        %v1318 = vmul.u32 %v1273, %v1264
        %v1319 = vadd.s32 %v1295, %v1314
        %vm1320 = vc.u32 %v1295, %v1314
        %v1321 = vadd.s32 %v1317, 1
        %v1322 = vsel %vm1320, %v1321, %v1317
        %v1323 = vadd.s32 %v1318, %v1322
        %v1324 = vadd.s32 %v1323, 536870912
        %v1325 = vshrl.u32 %v1324, 30
        %v1326 = vshll.u32 %v1325, 30
        %v1327 = vsub.s32 %v1323, %v1326
        %vm1328 = vcmp.lt.s32.totalorder %v1327, 0
        %v1329 = vsub.s32 0, %v1327
        %v1330 = vsel %vm1328, %v1329, %v1327
        %v1331 = vclz %v1330
        %v1332 = vsub.s32 %v1331, 2
        %vm1333 = vcmp.gt.s32.totalorder 0, %v1332
        %v1334 = vsel %vm1333, 0, %v1332
        %v1335 = vsub.s32 32, %v1334
        %v1336 = vshll.u32 %v1327, %v1334
        %v1337 = vshrl.u32 %v1319, %v1335
        %v1338 = vor.u32 %v1336, %v1337
        %v1339 = vsub.s32 4294967266, %v1334
        %v1340 = vadd.s32 %v1339, 127
        %v1341 = vshll.u32 %v1340, 23
        %v1342 = vor.u32 4788187, %v1341
        %v1343 = vand.u32 2147483647, %v1342
        %v1345 = vcvt.s32.f32 %v1338
        %v1346 = vmul.f32 %v1345, %v1343
        %v1347 = vxor.u32 %v1346, 2147483648
        %v1348 = vsel %vm1227, %v1347, %v1346
        %v1349 = vsub.s32 4, %v1325
        %v1350 = vsel %vm1227, %v1349, %v1325
        %v1351 = vsel %vm1226, %v447, %v1348
        %v1352 = vsel %vm1226, 0, %v1350
        %v1353 = vmul.f32 %v1351, %v1351
        %v1354 = vmul.f32 %v1353, -0.001358992
        %v1355 = vadd.f32 %v1354, 0.041655596
        %v1356 = vmul.f32 %v1353, %v1355
        %v1357 = vadd.f32 %v1356, -0.4999988
        %v1358 = vmul.f32 %v1353, %v1357
        %v1359 = vadd.f32 1.0, %v1358
        %v1360 = vmul.f32 %v1351, %v1351
        %v1361 = vmul.f32 %v1360, -0.00019511016
        %v1362 = vadd.f32 %v1361, 0.008332121
        %v1363 = vmul.f32 %v1360, %v1362
        %v1364 = vadd.f32 %v1363, -0.16666654
        %v1365 = vmul.f32 %v1360, %v1364
        %v1366 = vadd.f32 %v1365, 1.0
        %v1367 = vmul.f32 %v1366, %v1351
        %vm1368 = vweird.f32 %v447
        %v1369 = vadd.s32 %v1352, 3
        %v1370 = vand.u32 %v1369, 3
        %vm1371 = vcmp.lt.s32.totalorder %v1370, 2
        %vm1372 = vcmp.eq.s32.totalorder %v1370, 0
        %v1373 = vxor.u32 %v1367, 2147483648
        %v1374 = vsel %vm1372, %v1359, %v1373
        %vm1375 = vcmp.eq.s32.totalorder %v1370, 2
        %v1376 = vxor.u32 %v1359, 2147483648
        %v1377 = vsel %vm1375, %v1376, %v1367
        %v1378 = vsel %vm1371, %v1374, %v1377
        %v1379 = vsel %vm1368, nan, %v1378
        %v1380 = vand.u32 2147483647, %v448
        %vm1381 = vcmp.le.f32.partialorder %v1380, 0.7853982
        %vm1382 = vcmp.lt.s32.totalorder %v448, 0
        %v1383 = vand.u32 %v448, 2139095040
        %v1384 = vshrl.u32 %v1383, 23
        %v1385 = vsub.s32 %v1384, 127
        %v1386 = vand.u32 2147483647, %v448
        %v1387 = vand.u32 %v1386, 8388607
        %v1388 = vor.u32 %v1387, 8388608
        %v1389 = vsub.s32 0, %v1388
        %v1390 = vadd.s32 %v1385, 1
        %vm1391 = vcmp.gt.s32.totalorder %v1390, 0
        %v1392 = vsel %vm1391, %v1390, 0
        %v1393 = vshrl.u32 %v1392, 5
        %v1394 = vand.u32 %v1392, 31
        %v1395 = vsub.s32 32, %v1394
        %v1396 = vshrl.u32 683565275, %v1395
        %v1397 = vshll.u32 683565275, %v1394
        %v1398 = vshrl.u32 2475754826, %v1395
        %v1399 = vor.u32 %v1397, %v1398
        %v1400 = vshll.u32 2475754826, %v1394
        %v1401 = vshrl.u32 2131351028, %v1395
        %v1402 = vor.u32 %v1400, %v1401
        %v1403 = vshll.u32 2131351028, %v1394
        %v1404 = vshrl.u32 2102212464, %v1395
        %v1405 = vor.u32 %v1403, %v1404
        %v1406 = vshll.u32 2102212464, %v1394
        %v1407 = vshrl.u32 920167782, %v1395
        %v1408 = vor.u32 %v1406, %v1407
        %v1409 = vshll.u32 920167782, %v1394
        %v1410 = vshrl.u32 1326507024, %v1395
        %v1411 = vor.u32 %v1409, %v1410
        %vm1412 = vcmp.lt.s32.totalorder %v1393, 1
        %vm1413 = vcmp.lt.s32.totalorder %v1393, 2
        %vm1414 = vcmp.lt.s32.totalorder %v1393, 3
        %vm1415 = vcmp.lt.s32.totalorder %v1393, 4
        %v1416 = vsel %vm1412, %v1396, %v1399
        %v1417 = vsel %vm1415, %v1405, 2102212464
        %v1418 = vsel %vm1414, %v1402, %v1417
        %v1419 = vsel %vm1413, %v1416, %v1418
        %v1420 = vsel %vm1412, %v1399, %v1402
        %v1421 = vsel %vm1415, %v1408, 920167782
        %v1422 = vsel %vm1414, %v1405, %v1421
        %v1423 = vsel %vm1413, %v1420, %v1422
        %v1424 = vsel %vm1412, %v1402, %v1405
        %v1425 = vsel %vm1415, %v1411, 1326507024
        %v1426 = vsel %vm1414, %v1408, %v1425
        %v1427 = vsel %vm1413, %v1424, %v1426
        %v1428 = vshll.u32 %v1388, 8
        %v1429 = vand.u32 %v1428, 65535
        %v1430 = vshrl.u32 %v1428, 16
        %v1431 = vand.u32 %v1427, 65535
        %v1432 = vshrl.u32 %v1427, 16
        %v1433 = vmul.u32 %v1429, %v1431
        %v1434 = vmul.u32 %v1429, %v1432
        %v1435 = vmul.u32 %v1430, %v1431
        %v1436 = vmul.u32 %v1430, %v1432
        %v1437 = vshll.u32 %v1434, 16
        %v1438 = vshrl.u32 %v1434, 16
        %v1439 = vshll.u32 %v1435, 16
        %v1440 = vshrl.u32 %v1435, 16
        %vm1441 = vc.u32 %v1433, %v1437
        %v1442 = vsel %vm1441, 1, 0
        %v1443 = vadd.s32 %v1433, %v1437
        %v1444 = vadd.s32 %v1436, %v1442
        %vm1445 = vc.u32 %v1443, %v1439
        %v1446 = vsel %vm1445, 1, 0
        %v1447 = vadd.s32 %v1443, %v1439
        %v1448 = vadd.s32 %v1444, %v1446
        %v1449 = vadd.s32 %v1448, %v1438
        %v1450 = vadd.s32 %v1449, %v1440
        %v1451 = vand.u32 %v1428, 65535
        %v1452 = vshrl.u32 %v1428, 16
        %v1453 = vand.u32 %v1423, 65535
        %v1454 = vshrl.u32 %v1423, 16
        %v1455 = vmul.u32 %v1451, %v1453
        %v1456 = vmul.u32 %v1451, %v1454
        %v1457 = vmul.u32 %v1452, %v1453
        %v1458 = vmul.u32 %v1452, %v1454
        %v1459 = vshll.u32 %v1456, 16
        %v1460 = vshrl.u32 %v1456, 16
        %v1461 = vshll.u32 %v1457, 16
        %v1462 = vshrl.u32 %v1457, 16
        %vm1463 = vc.u32 %v1455, %v1459
        %v1464 = vsel %vm1463, 1, 0
        %v1465 = vadd.s32 %v1455, %v1459
        %v1466 = vadd.s32 %v1458, %v1464
        %vm1467 = vc.u32 %v1465, %v1461
        %v1468 = vsel %vm1467, 1, 0
        %v1469 = vadd.s32 %v1465, %v1461
        %v1470 = vadd.s32 %v1466, %v1468
        %v1471 = vadd.s32 %v1470, %v1460
        %v1472 = vadd.s32 %v1471, %v1462
        %v1473 = vmul.u32 %v1428, %v1419
        %v1474 = vadd.s32 %v1450, %v1469
        %vm1475 = vc.u32 %v1450, %v1469
        %v1476 = vadd.s32 %v1472, 1
        %v1477 = vsel %vm1475, %v1476, %v1472
        %v1478 = vadd.s32 %v1473, %v1477
        %v1479 = vadd.s32 %v1478, 536870912
        %v1480 = vshrl.u32 %v1479, 30
        %v1481 = vshll.u32 %v1480, 30
        %v1482 = vsub.s32 %v1478, %v1481
        %vm1483 = vcmp.lt.s32.totalorder %v1482, 0
        %v1484 = vsub.s32 0, %v1482
        %v1485 = vsel %vm1483, %v1484, %v1482
        %v1486 = vclz %v1485
        %v1487 = vsub.s32 %v1486, 2
        %vm1488 = vcmp.gt.s32.totalorder 0, %v1487
        %v1489 = vsel %vm1488, 0, %v1487
        %v1490 = vsub.s32 32, %v1489
        %v1491 = vshll.u32 %v1482, %v1489
        %v1492 = vshrl.u32 %v1474, %v1490
        %v1493 = vor.u32 %v1491, %v1492
        %v1494 = vsub.s32 4294967266, %v1489
        %v1495 = vadd.s32 %v1494, 127
        %v1496 = vshll.u32 %v1495, 23
        %v1497 = vor.u32 4788187, %v1496
        %v1498 = vand.u32 2147483647, %v1497
        %v1500 = vcvt.s32.f32 %v1493
        %v1501 = vmul.f32 %v1500, %v1498
        %v1502 = vxor.u32 %v1501, 2147483648
        %v1503 = vsel %vm1382, %v1502, %v1501
        %v1504 = vsub.s32 4, %v1480
        %v1505 = vsel %vm1382, %v1504, %v1480
        %v1506 = vsel %vm1381, %v448, %v1503
        %v1507 = vsel %vm1381, 0, %v1505
        %v1508 = vmul.f32 %v1506, %v1506
        %v1509 = vmul.f32 %v1508, -0.001358992
        %v1510 = vadd.f32 %v1509, 0.041655596
        %v1511 = vmul.f32 %v1508, %v1510
        %v1512 = vadd.f32 %v1511, -0.4999988
        %v1513 = vmul.f32 %v1508, %v1512
        %v1514 = vadd.f32 1.0, %v1513
        %v1515 = vmul.f32 %v1506, %v1506
        %v1516 = vmul.f32 %v1515, -0.00019511016
        %v1517 = vadd.f32 %v1516, 0.008332121
        %v1518 = vmul.f32 %v1515, %v1517
        %v1519 = vadd.f32 %v1518, -0.16666654
        %v1520 = vmul.f32 %v1515, %v1519
        %v1521 = vadd.f32 %v1520, 1.0
        %v1522 = vmul.f32 %v1521, %v1506
        %vm1523 = vweird.f32 %v448
        %v1524 = vadd.s32 %v1507, 3
        %v1525 = vand.u32 %v1524, 3
        %vm1526 = vcmp.lt.s32.totalorder %v1525, 2
        %vm1527 = vcmp.eq.s32.totalorder %v1525, 0
        %v1528 = vxor.u32 %v1522, 2147483648
        %v1529 = vsel %vm1527, %v1514, %v1528
        %vm1530 = vcmp.eq.s32.totalorder %v1525, 2
        %v1531 = vxor.u32 %v1514, 2147483648
        %v1532 = vsel %vm1530, %v1531, %v1522
        %v1533 = vsel %vm1526, %v1529, %v1532
        %v1534 = vsel %vm1523, nan, %v1533
        %v1535 = vand.u32 2147483647, %v449
        %vm1536 = vcmp.le.f32.partialorder %v1535, 0.7853982
        %vm1537 = vcmp.lt.s32.totalorder %v449, 0
        %v1538 = vand.u32 %v449, 2139095040
        %v1539 = vshrl.u32 %v1538, 23
        %v1540 = vsub.s32 %v1539, 127
        %v1541 = vand.u32 2147483647, %v449
        %v1542 = vand.u32 %v1541, 8388607
        %v1543 = vor.u32 %v1542, 8388608
        %v1544 = vsub.s32 0, %v1543
        %v1545 = vadd.s32 %v1540, 1
        %vm1546 = vcmp.gt.s32.totalorder %v1545, 0
        %v1547 = vsel %vm1546, %v1545, 0
        %v1548 = vshrl.u32 %v1547, 5
        %v1549 = vand.u32 %v1547, 31
        %v1550 = vsub.s32 32, %v1549
        %v1551 = vshrl.u32 683565275, %v1550
        %v1552 = vshll.u32 683565275, %v1549
        %v1553 = vshrl.u32 2475754826, %v1550
        %v1554 = vor.u32 %v1552, %v1553
        %v1555 = vshll.u32 2475754826, %v1549
        %v1556 = vshrl.u32 2131351028, %v1550
        %v1557 = vor.u32 %v1555, %v1556
        %v1558 = vshll.u32 2131351028, %v1549
        %v1559 = vshrl.u32 2102212464, %v1550
        %v1560 = vor.u32 %v1558, %v1559
        %v1561 = vshll.u32 2102212464, %v1549
        %v1562 = vshrl.u32 920167782, %v1550
        %v1563 = vor.u32 %v1561, %v1562
        %v1564 = vshll.u32 920167782, %v1549
        %v1565 = vshrl.u32 1326507024, %v1550
        %v1566 = vor.u32 %v1564, %v1565
        %vm1567 = vcmp.lt.s32.totalorder %v1548, 1
        %vm1568 = vcmp.lt.s32.totalorder %v1548, 2
        %vm1569 = vcmp.lt.s32.totalorder %v1548, 3
        %vm1570 = vcmp.lt.s32.totalorder %v1548, 4
        %v1571 = vsel %vm1567, %v1551, %v1554
        %v1572 = vsel %vm1570, %v1560, 2102212464
        %v1573 = vsel %vm1569, %v1557, %v1572
        %v1574 = vsel %vm1568, %v1571, %v1573
        %v1575 = vsel %vm1567, %v1554, %v1557
        %v1576 = vsel %vm1570, %v1563, 920167782
        %v1577 = vsel %vm1569, %v1560, %v1576
        %v1578 = vsel %vm1568, %v1575, %v1577
        %v1579 = vsel %vm1567, %v1557, %v1560
        %v1580 = vsel %vm1570, %v1566, 1326507024
        %v1581 = vsel %vm1569, %v1563, %v1580
        %v1582 = vsel %vm1568, %v1579, %v1581
        %v1583 = vshll.u32 %v1543, 8
        %v1584 = vand.u32 %v1583, 65535
        %v1585 = vshrl.u32 %v1583, 16
        %v1586 = vand.u32 %v1582, 65535
        %v1587 = vshrl.u32 %v1582, 16
        %v1588 = vmul.u32 %v1584, %v1586
        %v1589 = vmul.u32 %v1584, %v1587
        %v1590 = vmul.u32 %v1585, %v1586
        %v1591 = vmul.u32 %v1585, %v1587
        %v1592 = vshll.u32 %v1589, 16
        %v1593 = vshrl.u32 %v1589, 16
        %v1594 = vshll.u32 %v1590, 16
        %v1595 = vshrl.u32 %v1590, 16
        %vm1596 = vc.u32 %v1588, %v1592
        %v1597 = vsel %vm1596, 1, 0
        %v1598 = vadd.s32 %v1588, %v1592
        %v1599 = vadd.s32 %v1591, %v1597
        %vm1600 = vc.u32 %v1598, %v1594
        %v1601 = vsel %vm1600, 1, 0
        %v1602 = vadd.s32 %v1598, %v1594
        %v1603 = vadd.s32 %v1599, %v1601
        %v1604 = vadd.s32 %v1603, %v1593
        %v1605 = vadd.s32 %v1604, %v1595
        %v1606 = vand.u32 %v1583, 65535
        %v1607 = vshrl.u32 %v1583, 16
        %v1608 = vand.u32 %v1578, 65535
        %v1609 = vshrl.u32 %v1578, 16
        %v1610 = vmul.u32 %v1606, %v1608
        %v1611 = vmul.u32 %v1606, %v1609
        %v1612 = vmul.u32 %v1607, %v1608
        %v1613 = vmul.u32 %v1607, %v1609
        %v1614 = vshll.u32 %v1611, 16
        %v1615 = vshrl.u32 %v1611, 16
        %v1616 = vshll.u32 %v1612, 16
        %v1617 = vshrl.u32 %v1612, 16
        %vm1618 = vc.u32 %v1610, %v1614
        %v1619 = vsel %vm1618, 1, 0
        %v1620 = vadd.s32 %v1610, %v1614
        %v1621 = vadd.s32 %v1613, %v1619
        %vm1622 = vc.u32 %v1620, %v1616
        %v1623 = vsel %vm1622, 1, 0
        %v1624 = vadd.s32 %v1620, %v1616
        %v1625 = vadd.s32 %v1621, %v1623
        %v1626 = vadd.s32 %v1625, %v1615
        %v1627 = vadd.s32 %v1626, %v1617
        %v1628 = vmul.u32 %v1583, %v1574
        %v1629 = vadd.s32 %v1605, %v1624
        %vm1630 = vc.u32 %v1605, %v1624
        %v1631 = vadd.s32 %v1627, 1
        %v1632 = vsel %vm1630, %v1631, %v1627
        %v1633 = vadd.s32 %v1628, %v1632
        %v1634 = vadd.s32 %v1633, 536870912
        %v1635 = vshrl.u32 %v1634, 30
        %v1636 = vshll.u32 %v1635, 30
        %v1637 = vsub.s32 %v1633, %v1636
        %vm1638 = vcmp.lt.s32.totalorder %v1637, 0
        %v1639 = vsub.s32 0, %v1637
        %v1640 = vsel %vm1638, %v1639, %v1637
        %v1641 = vclz %v1640
        %v1642 = vsub.s32 %v1641, 2
        %vm1643 = vcmp.gt.s32.totalorder 0, %v1642
        %v1644 = vsel %vm1643, 0, %v1642
        %v1645 = vsub.s32 32, %v1644
        %v1646 = vshll.u32 %v1637, %v1644
        %v1647 = vshrl.u32 %v1629, %v1645
        %v1648 = vor.u32 %v1646, %v1647
        %v1649 = vsub.s32 4294967266, %v1644
        %v1650 = vadd.s32 %v1649, 127
        %v1651 = vshll.u32 %v1650, 23
        %v1652 = vor.u32 4788187, %v1651
        %v1653 = vand.u32 2147483647, %v1652
        %v1655 = vcvt.s32.f32 %v1648
        %v1656 = vmul.f32 %v1655, %v1653
        %v1657 = vxor.u32 %v1656, 2147483648
        %v1658 = vsel %vm1537, %v1657, %v1656
        %v1659 = vsub.s32 4, %v1635
        %v1660 = vsel %vm1537, %v1659, %v1635
        %v1661 = vsel %vm1536, %v449, %v1658
        %v1662 = vsel %vm1536, 0, %v1660
        %v1663 = vmul.f32 %v1661, %v1661
        %v1664 = vmul.f32 %v1663, -0.001358992
        %v1665 = vadd.f32 %v1664, 0.041655596
        %v1666 = vmul.f32 %v1663, %v1665
        %v1667 = vadd.f32 %v1666, -0.4999988
        %v1668 = vmul.f32 %v1663, %v1667
        %v1669 = vadd.f32 1.0, %v1668
        %v1670 = vmul.f32 %v1661, %v1661
        %v1671 = vmul.f32 %v1670, -0.00019511016
        %v1672 = vadd.f32 %v1671, 0.008332121
        %v1673 = vmul.f32 %v1670, %v1672
        %v1674 = vadd.f32 %v1673, -0.16666654
        %v1675 = vmul.f32 %v1670, %v1674
        %v1676 = vadd.f32 %v1675, 1.0
        %v1677 = vmul.f32 %v1676, %v1661
        %vm1678 = vweird.f32 %v449
        %v1679 = vadd.s32 %v1662, 3
        %v1680 = vand.u32 %v1679, 3
        %vm1681 = vcmp.lt.s32.totalorder %v1680, 2
        %vm1682 = vcmp.eq.s32.totalorder %v1680, 0
        %v1683 = vxor.u32 %v1677, 2147483648
        %v1684 = vsel %vm1682, %v1669, %v1683
        %vm1685 = vcmp.eq.s32.totalorder %v1680, 2
        %v1686 = vxor.u32 %v1669, 2147483648
        %v1687 = vsel %vm1685, %v1686, %v1677
        %v1688 = vsel %vm1681, %v1684, %v1687
        %v1689 = vsel %vm1678, nan, %v1688
        %v1690 = vld [vmem:[%s4] sm:$0xff]
        %v1691 = vld [vmem:[%s4 + $0x8] sm:$0xff]
        %v1692 = vld [vmem:[%s4 + $0x10] sm:$0xff]
        %v1693 = vld [vmem:[%s4 + $0x18] sm:$0xff]
        %v1694 = vld [vmem:[%s4 + $0x20] sm:$0xff]
        %v1695 = vld [vmem:[%s4 + $0x28] sm:$0xff]
        %v1696 = vld [vmem:[%s4 + $0x30] sm:$0xff]
        %v1697 = vld [vmem:[%s4 + $0x38] sm:$0xff]
        %v1698 = vld [vmem:[%s4 + $0x40] sm:$0xff]
        %v1699 = vld [vmem:[%s4 + $0x48] sm:$0xff]
        %v1700 = vld [vmem:[%s4 + $0x50] sm:$0xff]
        %v1701 = vld [vmem:[%s4 + $0x58] sm:$0xff]
        %v1702 = vld [vmem:[%s4 + $0x60] sm:$0xff]
        %v1703 = vld [vmem:[%s4 + $0x68] sm:$0xff]
        %v1704 = vld [vmem:[%s4 + $0x70] sm:$0xff]
        %v1705 = vld [vmem:[%s4 + $0x78] sm:$0xff]
        %v1706 = vld [vmem:[%s3] sm:$0x1]
        %v1708 = vperm.slane %v1706, 0
        %1710 = vmatpush.msra.mxu0 %v1705
        %1711 = vmatpush.msra.mxu0 %v1704
        %1712 = vmatpush.msra.mxu0 %v1703
        %1713 = vmatpush.msra.mxu0 %v1702
        %1714 = vmatpush.msra.mxu0 %v1701
        %1715 = vmatpush.msra.mxu0 %v1700
        %1716 = vmatpush.msra.mxu0 %v1699
        %1717 = vmatpush.msra.mxu0 %v1698
        %1718 = vmatpush.msra.mxu0 %v1697
        %1719 = vmatpush.msra.mxu0 %v1696
        %1720 = vmatpush.msra.mxu0 %v1695
        %1721 = vmatpush.msra.mxu0 %v1694
        %1722 = vmatpush.msra.mxu0 %v1693
        %1723 = vmatpush.msra.mxu0 %v1692
        %1724 = vmatpush.msra.mxu0 %v1691
        %1725 = vmatpush.msra.mxu0 %v1690
        %1726 = vmatmul.f32.gmra.mxu0 %v604
        %v1727 = vpop.f32.mrf.mxu0
        %v1728 = vadd.f32 %v1708, %v1727
        %1729 = vmatmul.f32.gmra.mxu0 %v759
        %v1730 = vpop.f32.mrf.mxu0
        %v1731 = vadd.f32 %v1708, %v1730
        %1732 = vmatmul.f32.gmra.mxu0 %v914
        %v1733 = vpop.f32.mrf.mxu0
        %v1734 = vadd.f32 %v1708, %v1733
        %1735 = vmatmul.f32.gmra.mxu0 %v1069
        %v1736 = vpop.f32.mrf.mxu0
        %v1737 = vadd.f32 %v1708, %v1736
        %1738 = vmatmul.f32.gmra.mxu0 %v1224
        %v1739 = vpop.f32.mrf.mxu0
        %v1740 = vadd.f32 %v1708, %v1739
        %1741 = vmatmul.f32.gmra.mxu0 %v1379
        %v1742 = vpop.f32.mrf.mxu0
        %v1743 = vadd.f32 %v1708, %v1742
        %1744 = vmatmul.f32.gmra.mxu0 %v1534
        %v1745 = vpop.f32.mrf.mxu0
        %v1746 = vadd.f32 %v1708, %v1745
        %1747 = vmatmul.f32.gmra.mxu0 %v1689
        %v1748 = vpop.f32.mrf.mxu0
        %v1749 = vadd.f32 %v1708, %v1748
        %1750 = vdwg.mxu0
        %v1751 = vmax.f32 %v1728, 0.0
        %v1752 = vmax.f32 %v1731, 0.0
        %v1753 = vmax.f32 %v1734, 0.0
        %v1754 = vmax.f32 %v1737, 0.0
        %v1755 = vmax.f32 %v1740, 0.0
        %v1756 = vmax.f32 %v1743, 0.0
        %v1757 = vmax.f32 %v1746, 0.0
        %v1758 = vmax.f32 %v1749, 0.0
        %v1759 = vld [vmem:[%s5] sm:$0xff]
        %v1760 = vld [vmem:[%s5 + $0x8] sm:$0xff]
        %v1761 = vld [vmem:[%s5 + $0x10] sm:$0xff]
        %v1762 = vld [vmem:[%s5 + $0x18] sm:$0xff]
        %v1763 = vld [vmem:[%s5 + $0x20] sm:$0xff]
        %v1764 = vld [vmem:[%s5 + $0x28] sm:$0xff]
        %v1765 = vld [vmem:[%s5 + $0x30] sm:$0xff]
        %v1766 = vld [vmem:[%s5 + $0x38] sm:$0xff]
        %v1767 = vld [vmem:[%s5 + $0x40] sm:$0xff]
        %v1768 = vld [vmem:[%s5 + $0x48] sm:$0xff]
        %v1769 = vld [vmem:[%s5 + $0x50] sm:$0xff]
        %v1770 = vld [vmem:[%s5 + $0x58] sm:$0xff]
        %v1771 = vld [vmem:[%s5 + $0x60] sm:$0xff]
        %v1772 = vld [vmem:[%s5 + $0x68] sm:$0xff]
        %v1773 = vld [vmem:[%s5 + $0x70] sm:$0xff]
        %v1774 = vld [vmem:[%s5 + $0x78] sm:$0xff]
        %v1775 = vld [vmem:[%s6] sm:$0x1]
        %v1777 = vperm.slane %v1775, 0
        %1779 = vmatpush.msra.mxu0 %v1774
        %1780 = vmatpush.msra.mxu0 %v1773
        %1781 = vmatpush.msra.mxu0 %v1772
        %1782 = vmatpush.msra.mxu0 %v1771
        %1783 = vmatpush.msra.mxu0 %v1770
        %1784 = vmatpush.msra.mxu0 %v1769
        %1785 = vmatpush.msra.mxu0 %v1768
        %1786 = vmatpush.msra.mxu0 %v1767
        %1787 = vmatpush.msra.mxu0 %v1766
        %1788 = vmatpush.msra.mxu0 %v1765
        %1789 = vmatpush.msra.mxu0 %v1764
        %1790 = vmatpush.msra.mxu0 %v1763
        %1791 = vmatpush.msra.mxu0 %v1762
        %1792 = vmatpush.msra.mxu0 %v1761
        %1793 = vmatpush.msra.mxu0 %v1760
        %1794 = vmatpush.msra.mxu0 %v1759
        %1795 = vmatmul.f32.gmra.mxu0 %v1751
        %v1796 = vpop.f32.mrf.mxu0
        %v1797 = vadd.f32 %v1777, %v1796
        %1798 = vmatmul.f32.gmra.mxu0 %v1752
        %v1799 = vpop.f32.mrf.mxu0
        %v1800 = vadd.f32 %v1777, %v1799
        %1801 = vmatmul.f32.gmra.mxu0 %v1753
        %v1802 = vpop.f32.mrf.mxu0
        %v1803 = vadd.f32 %v1777, %v1802
        %1804 = vmatmul.f32.gmra.mxu0 %v1754
        %v1805 = vpop.f32.mrf.mxu0
        %v1806 = vadd.f32 %v1777, %v1805
        %1807 = vmatmul.f32.gmra.mxu0 %v1755
        %v1808 = vpop.f32.mrf.mxu0
        %v1809 = vadd.f32 %v1777, %v1808
        %1810 = vmatmul.f32.gmra.mxu0 %v1756
        %v1811 = vpop.f32.mrf.mxu0
        %v1812 = vadd.f32 %v1777, %v1811
        %1813 = vmatmul.f32.gmra.mxu0 %v1757
        %v1814 = vpop.f32.mrf.mxu0
        %v1815 = vadd.f32 %v1777, %v1814
        %1816 = vmatmul.f32.gmra.mxu0 %v1758
        %v1817 = vpop.f32.mrf.mxu0
        %v1818 = vadd.f32 %v1777, %v1817
        %1819 = vdwg.mxu0
        %1820 = vst [vmem:[%s272] sm:$0xff] %v1797
        %1821 = vst [vmem:[%s272 + $0x8] sm:$0xff] %v1800
        %1822 = vst [vmem:[%s272 + $0x10] sm:$0xff] %v1803
        %1823 = vst [vmem:[%s272 + $0x18] sm:$0xff] %v1806
        %1824 = vst [vmem:[%s272 + $0x20] sm:$0xff] %v1809
        %1825 = vst [vmem:[%s272 + $0x28] sm:$0xff] %v1812
        %1826 = vst [vmem:[%s272 + $0x30] sm:$0xff] %v1815
        %1827 = vst [vmem:[%s272 + $0x38] sm:$0xff] %v1818
        %s1828 = sand.u32 %s181, 1
        %s1829 = scalar_lea.sflag [#allocation3], %s1828
        %s1830 = sand.u32 %s181, 1
        %s1831 = smul.addr %s1830, 64
        %s1832 = scalar_lea.vmem [#allocation2], %s1831
        // Predicated region
        $region49: #{code_modulation_forward.1} parent=47 // pred_check
          %p1833 = pneg %p191
        $region50: #{code_modulation_forward.1} parent=47 // pred_check_branch
          %1835 = sbr.rel (%p1833) target = $region52
        $region51: #{code_modulation_forward.1} parent=47 // pred_region
          %s1836 = smul.u32 8, %s21
          %1838 = vsyncadd %s1829, 0
          %s1839 = smul.addr %s1836, 8
          %s1840 = scalar_lea.hbm %s7, %s1839
          %s1841 = sshll.u32 %s1832, 4
          %s1842 = int_to_ptr.vmem [resolvable:$true] %s1841
          %s1843 = sshll.u32 %s1840, 4
          %s1844 = int_to_ptr.hbm [resolvable:$true] %s1843
          %1849 = dma.vmem_to_hbm [thread:$0]  %s1842, 1024, %s1844, %s1829, 128, 128, 8
        $region52: #{code_modulation_forward.1} parent=47 // pred_fallthru
          _
      $region48: #{code_modulation_forward.1} parent=5 // pred_fallthru
        _
      %p1850 = scmp.le.s32.totalorder 2, %s16
      // Predicated region
      $region53: #{code_modulation_forward.1} parent=5 // pred_check
        %p1851 = pneg %p1850
      $region54: #{code_modulation_forward.1} parent=5 // pred_check_branch
        %1853 = sbr.rel (%p1851) target = $region56
      $region55: #{code_modulation_forward.1} parent=5 // pred_region
        %s1854 = ssub.s32 %s16, 2
        // Predicated region
        $region57: #{code_modulation_forward.1} parent=55 // pred_check
          %p1855 = pneg %p197
        $region58: #{code_modulation_forward.1} parent=55 // pred_check_branch
          %1857 = sbr.rel (%p1855) target = $region60
        $region59: #{code_modulation_forward.1} parent=55 // pred_region
          %s1858 = sand.u32 %s182, 1
          %s1859 = scalar_lea.sflag [#allocation3], %s1858
          %s1860 = sand.u32 %s182, 1
          %s1861 = smul.addr %s1860, 64
          %s1862 = scalar_lea.vmem [#allocation2], %s1861
          %1864 = dma.done %s1859, 1024
        $region60: #{code_modulation_forward.1} parent=55 // pred_fallthru
          _
      $region56: #{code_modulation_forward.1} parent=5 // pred_fallthru
        _
    $region6: #{code_modulation_forward.1} parent=1 // loop_footer
      %s20 = sadd.s32 1, %s16
    $region7: #{code_modulation_forward.1} parent=1 // loop_footer_branch
      %15 = sbr.rel target = $region3
    $region8: #{code_modulation_forward.1} parent=1 // loop_exit
      _
    %1865 = vsyncpa [#allocation3], 1
    %s1866 = scalar_lea.sflag [#allocation3], 1
    %1867 = vsyncpa %s1866, 1

</llo_original>
